<compile_context>
chip_gen: v5e
topology: v5e:2x2
jax: 0.10.0
libtpu: 0.0.40
codegen_flags: <defaults>
</compile_context>

<pallas_src>
import functools

import jax
import jax.numpy as jnp
from jax.experimental import pallas as pl
from jax.experimental.pallas import tpu as pltpu

K_D = 7            # conv kernel size (from the PyTorch module)
STRIDE = 2         # dim == 2  ->  stride = dim = 2
PAD = K_D // 2     # 3
LANE = 128         # TPU lane width; C_out padded to a multiple of this


def _convblock_kernel(x_ref, w_ref, bias_ref, scale_ref, shift_ref, out_ref):
    """One grid step computes one NHWC output row (all ow, all padded C_out).

    x_ref   : (4, H2, W2, C_in)      bf16  space-to-depth phases of one image
    w_ref   : (49, C_in, C_out_pad)  bf16  per-tap weight matrices
    bias_ref, scale_ref, shift_ref : (1, C_out_pad) f32
    out_ref : (1, 1, OW, C_out_pad)  f32   lane-dense output row
    """
    oh = pl.program_id(1)
    ow_tile = out_ref.shape[2]
    co_pad = out_ref.shape[3]

    acc = jnp.zeros((ow_tile, co_pad), jnp.float32)
    # 49 accumulating taps; each tap reads a contiguous unit-stride window of
    # the space-to-depth slab (no strided loads, no im2col materialization).
    for kh in range(K_D):
        a, dh = kh % 2, kh // 2
        row = oh + dh                                    # dynamic (untiled dim)
        for kw in range(K_D):
            b, dw = kw % 2, kw // 2
            xt = x_ref[2 * a + b, row, dw:dw + ow_tile, :]   # (OW, C_in) bf16
            wt = w_ref[kh * K_D + kw]                        # (C_in, C_out_pad)
            acc = acc + jnp.dot(xt, wt, preferred_element_type=jnp.float32)

    # Fused f32 epilogue: conv bias -> ELU (alpha=1) -> BN affine, one store.
    pre = acc + bias_ref[...]
    act = jnp.where(pre > 0.0, pre, jnp.exp(pre) - 1.0)
    y = act * scale_ref[...] + shift_ref[...]
    out_ref[0, 0] = y.astype(out_ref.dtype)


def conv_block_forward(x, weight, bias, gamma, beta, running_mean, running_var,
                       eps=1e-5):
    """NCHW in, NCHW out — ConvBlock(in_ch, out_ch, dim=2).forward, eval mode."""
    n, c_in, h, w = x.shape
    c_out = weight.shape[0]
    oh = (h + 2 * PAD - K_D) // STRIDE + 1
    ow = (w + 2 * PAD - K_D) // STRIDE + 1
    c_out_pad = ((c_out + LANE - 1) // LANE) * LANE

    # ---- wrapper-side layout work (pure permutations / tiny tensors) -------
    # Zero-pad so the stride-2 receptive field always lands inside the buffer
    # and H_pad / W_pad are even (space-to-depth friendly).
    h_pad = 2 * oh + K_D - 1
    w_pad = 2 * ow + K_D - 1
    x_nhwc = jnp.transpose(x, (0, 2, 3, 1))
    x_sp = jnp.pad(x_nhwc, ((0, 0),
                            (PAD, h_pad - PAD - h),
                            (PAD, w_pad - PAD - w),
                            (0, 0)))
    # Space-to-depth: x_s2d[n*4 + a*2 + b, i, j, c] = x_pad[n, 2i+a, 2j+b, c]
    h2, w2 = h_pad // 2, w_pad // 2
    x_s2d = x_sp.reshape(n, h2, 2, w2, 2, c_in).transpose(0, 2, 4, 1, 3, 5)
    x_s2d = x_s2d.reshape(n * 4, h2, w2, c_in).astype(jnp.bfloat16)

    # Per-tap weight matrices, C_out zero-padded (padded channels stay 0).
    w_taps = jnp.transpose(weight, (2, 3, 1, 0)).reshape(K_D * K_D, c_in, c_out)
    w_taps = jnp.pad(w_taps, ((0, 0), (0, 0), (0, c_out_pad - c_out)))
    w_taps = w_taps.astype(jnp.bfloat16)

    # Precompute BN affine (eval mode / running stats).
    scale = gamma * jax.lax.rsqrt(running_var + eps)
    shift = beta - running_mean * scale

    def pad_vec(v):
        return jnp.pad(v.astype(jnp.float32),
                       (0, c_out_pad - c_out)).reshape(1, c_out_pad)

    bias_p, scale_p, shift_p = pad_vec(bias), pad_vec(scale), pad_vec(shift)

    out_nhwc = pl.pallas_call(
        _convblock_kernel,
        out_shape=jax.ShapeDtypeStruct((n, oh, ow, c_out_pad), jnp.float32),
        grid=(n, oh),
        in_specs=[
            # Whole space-to-depth image of batch element i: DMA'd once per
            # batch element (constant along the oh axis) and reused.
            pl.BlockSpec((4, h2, w2, c_in), lambda i, j: (i, 0, 0, 0)),
            # Weights / bias / BN constants: fully VMEM resident.
            pl.BlockSpec((K_D * K_D, c_in, c_out_pad), lambda i, j: (0, 0, 0)),
            pl.BlockSpec((1, c_out_pad), lambda i, j: (0, 0)),
            pl.BlockSpec((1, c_out_pad), lambda i, j: (0, 0)),
            pl.BlockSpec((1, c_out_pad), lambda i, j: (0, 0)),
        ],
        out_specs=pl.BlockSpec((1, 1, ow, c_out_pad),
                               lambda i, j: (i, j, 0, 0)),
        compiler_params=pltpu.CompilerParams(
            dimension_semantics=("parallel", "parallel")),
    )(x_s2d, w_taps, bias_p, scale_p, shift_p)

    # TODO(synk): Dropout2d(DR_S) is stochastic only in train mode; the eval
    # forward is the identity, so it is intentionally omitted here.
    # Un-pad channels and return NCHW (PyTorch layout).
    return jnp.transpose(out_nhwc[..., :c_out], (0, 3, 1, 2))


if __name__ == "__main__":
    key = jax.random.PRNGKey(0)
    k1, k2, k3, k4, k5, k6, k7 = jax.random.split(key, 7)

    N, C_IN, H, W = 2, 4, 16, 16
    C_OUT = 8

    x = jax.random.normal(k1, (N, C_IN, H, W), jnp.float32)
    weight = 0.05 * jax.random.normal(k2, (C_OUT, C_IN, K_D, K_D), jnp.float32)
    bias = 0.1 * jax.random.normal(k3, (C_OUT,), jnp.float32)
    gamma = 1.0 + 0.1 * jax.random.normal(k4, (C_OUT,), jnp.float32)
    beta = 0.1 * jax.random.normal(k5, (C_OUT,), jnp.float32)
    running_mean = 0.1 * jax.random.normal(k6, (C_OUT,), jnp.float32)
    running_var = jnp.abs(jax.random.normal(k7, (C_OUT,), jnp.float32)) + 0.5

    fwd = jax.jit(functools.partial(conv_block_forward, eps=1e-5))
    y = jax.block_until_ready(fwd(x, weight, bias, gamma, beta,
                                  running_mean, running_var))

    # Sanity check vs. plain-XLA reference on identically bf16-quantized inputs.
    xq = x.astype(jnp.bfloat16).astype(jnp.float32)
    wq = weight.astype(jnp.bfloat16).astype(jnp.float32)
    conv = jax.lax.conv_general_dilated(
        xq, wq, window_strides=(STRIDE, STRIDE),
        padding=((PAD, PAD), (PAD, PAD)),
        dimension_numbers=("NCHW", "OIHW", "NCHW")) + bias[None, :, None, None]
    act = jnp.where(conv > 0, conv, jnp.expm1(conv))
    scale = gamma * jax.lax.rsqrt(running_var + 1e-5)
    shift = beta - running_mean * scale
    ref = act * scale[None, :, None, None] + shift[None, :, None, None]

    assert y.shape == (N, C_OUT, H // 2, W // 2), y.shape
    err = float(jnp.max(jnp.abs(y - ref)))
    assert err < 5e-2, f"max abs error vs reference: {err}"
    print("KERNEL_OK")
</pallas_src>

<mosaic_0001>
module attributes {stable_mosaic.version = 11 : i64} {
  func.func @_convblock_kernel(%arg0: i32, %arg1: i32, %arg2: memref<4x11x11x4xbf16, #tpu.memory_space<vmem>>, %arg3: memref<49x4x128xbf16, #tpu.memory_space<vmem>>, %arg4: memref<1x128xf32, #tpu.memory_space<vmem>>, %arg5: memref<1x128xf32, #tpu.memory_space<vmem>>, %arg6: memref<1x128xf32, #tpu.memory_space<vmem>>, %arg7: memref<1x1x8x128xf32, #tpu.memory_space<vmem>>) attributes {dimension_semantics = [#tpu.dimension_semantics<parallel>, #tpu.dimension_semantics<parallel>], iteration_bounds = array<i64: 2, 8>, scalar_prefetch = 0 : i64, scratch_operands = 0 : i64, tpu.core_type = #tpu.core_type<tc>, window_params = [{transform_indices = @transform_0, window_bounds = array<i64: 4, 11, 11, 4>}, {pipeline_mode = #tpu.pipeline_mode<synchronous>, transform_indices = @transform_1, window_bounds = array<i64: 49, 4, 128>}, {pipeline_mode = #tpu.pipeline_mode<synchronous>, transform_indices = @transform_2, window_bounds = array<i64: 1, 128>}, {pipeline_mode = #tpu.pipeline_mode<synchronous>, transform_indices = @transform_3, window_bounds = array<i64: 1, 128>}, {pipeline_mode = #tpu.pipeline_mode<synchronous>, transform_indices = @transform_4, window_bounds = array<i64: 1, 128>}, {transform_indices = @transform_5, window_bounds = array<i64: 1, 1, 8, 128>}]} {
    %cst = arith.constant 0.000000e+00 : f32
    %0 = vector.broadcast %cst : f32 to vector<8x128xf32>
    %c0_i32 = arith.constant 0 : i32
    %1 = arith.addi %arg1, %c0_i32 : i32
    %c0 = arith.constant 0 : index
    %2 = arith.index_cast %1 : i32 to index
    %c0_0 = arith.constant 0 : index
    %c0_1 = arith.constant 0 : index
    %3 = vector.load %arg2[%c0, %2, %c0_0, %c0_1] : memref<4x11x11x4xbf16, #tpu.memory_space<vmem>>, vector<1x1x8x4xbf16>
    %4 = vector.shape_cast %3 : vector<1x1x8x4xbf16> to vector<8x4xbf16>
    %c0_2 = arith.constant 0 : index
    %c0_3 = arith.constant 0 : index
    %c0_4 = arith.constant 0 : index
    %5 = vector.load %arg3[%c0_2, %c0_3, %c0_4] : memref<49x4x128xbf16, #tpu.memory_space<vmem>>, vector<1x4x128xbf16>
    %6 = vector.shape_cast %5 : vector<1x4x128xbf16> to vector<4x128xbf16>
    %cst_5 = arith.constant dense<0.000000e+00> : vector<8x128xf32>
    %7 = tpu.matmul %4, %6, %cst_5 {dimension_numbers = #tpu.dot_dimension_numbers<[1], [0], [0], [1], [0, 0, 1, 1], [], []>} : vector<8x4xbf16>, vector<4x128xbf16>, vector<8x128xf32> -> vector<8x128xf32>
    %8 = arith.addf %0, %7 : vector<8x128xf32>
    %c1 = arith.constant 1 : index
    %9 = arith.index_cast %1 : i32 to index
    %c0_6 = arith.constant 0 : index
    %c0_7 = arith.constant 0 : index
    %10 = vector.load %arg2[%c1, %9, %c0_6, %c0_7] : memref<4x11x11x4xbf16, #tpu.memory_space<vmem>>, vector<1x1x8x4xbf16>
    %11 = vector.shape_cast %10 : vector<1x1x8x4xbf16> to vector<8x4xbf16>
    %c1_8 = arith.constant 1 : index
    %c0_9 = arith.constant 0 : index
    %c0_10 = arith.constant 0 : index
    %12 = vector.load %arg3[%c1_8, %c0_9, %c0_10] : memref<49x4x128xbf16, #tpu.memory_space<vmem>>, vector<1x4x128xbf16>
    %13 = vector.shape_cast %12 : vector<1x4x128xbf16> to vector<4x128xbf16>
    %cst_11 = arith.constant dense<0.000000e+00> : vector<8x128xf32>
    %14 = tpu.matmul %11, %13, %cst_11 {dimension_numbers = #tpu.dot_dimension_numbers<[1], [0], [0], [1], [0, 0, 1, 1], [], []>} : vector<8x4xbf16>, vector<4x128xbf16>, vector<8x128xf32> -> vector<8x128xf32>
    %15 = arith.addf %8, %14 : vector<8x128xf32>
    %c0_12 = arith.constant 0 : index
    %16 = arith.index_cast %1 : i32 to index
    %c1_13 = arith.constant 1 : index
    %c0_14 = arith.constant 0 : index
    %17 = vector.load %arg2[%c0_12, %16, %c1_13, %c0_14] : memref<4x11x11x4xbf16, #tpu.memory_space<vmem>>, vector<1x1x8x4xbf16>
    %18 = vector.shape_cast %17 : vector<1x1x8x4xbf16> to vector<8x4xbf16>
    %c2 = arith.constant 2 : index
    %c0_15 = arith.constant 0 : index
    %c0_16 = arith.constant 0 : index
    %19 = vector.load %arg3[%c2, %c0_15, %c0_16] : memref<49x4x128xbf16, #tpu.memory_space<vmem>>, vector<1x4x128xbf16>
    %20 = vector.shape_cast %19 : vector<1x4x128xbf16> to vector<4x128xbf16>
    %cst_17 = arith.constant dense<0.000000e+00> : vector<8x128xf32>
    %21 = tpu.matmul %18, %20, %cst_17 {dimension_numbers = #tpu.dot_dimension_numbers<[1], [0], [0], [1], [0, 0, 1, 1], [], []>} : vector<8x4xbf16>, vector<4x128xbf16>, vector<8x128xf32> -> vector<8x128xf32>
    %22 = arith.addf %15, %21 : vector<8x128xf32>
    %c1_18 = arith.constant 1 : index
    %23 = arith.index_cast %1 : i32 to index
    %c1_19 = arith.constant 1 : index
    %c0_20 = arith.constant 0 : index
    %24 = vector.load %arg2[%c1_18, %23, %c1_19, %c0_20] : memref<4x11x11x4xbf16, #tpu.memory_space<vmem>>, vector<1x1x8x4xbf16>
    %25 = vector.shape_cast %24 : vector<1x1x8x4xbf16> to vector<8x4xbf16>
    %c3 = arith.constant 3 : index
    %c0_21 = arith.constant 0 : index
    %c0_22 = arith.constant 0 : index
    %26 = vector.load %arg3[%c3, %c0_21, %c0_22] : memref<49x4x128xbf16, #tpu.memory_space<vmem>>, vector<1x4x128xbf16>
    %27 = vector.shape_cast %26 : vector<1x4x128xbf16> to vector<4x128xbf16>
    %cst_23 = arith.constant dense<0.000000e+00> : vector<8x128xf32>
    %28 = tpu.matmul %25, %27, %cst_23 {dimension_numbers = #tpu.dot_dimension_numbers<[1], [0], [0], [1], [0, 0, 1, 1], [], []>} : vector<8x4xbf16>, vector<4x128xbf16>, vector<8x128xf32> -> vector<8x128xf32>
    %29 = arith.addf %22, %28 : vector<8x128xf32>
    %c0_24 = arith.constant 0 : index
    %30 = arith.index_cast %1 : i32 to index
    %c2_25 = arith.constant 2 : index
    %c0_26 = arith.constant 0 : index
    %31 = vector.load %arg2[%c0_24, %30, %c2_25, %c0_26] : memref<4x11x11x4xbf16, #tpu.memory_space<vmem>>, vector<1x1x8x4xbf16>
    %32 = vector.shape_cast %31 : vector<1x1x8x4xbf16> to vector<8x4xbf16>
    %c4 = arith.constant 4 : index
    %c0_27 = arith.constant 0 : index
    %c0_28 = arith.constant 0 : index
    %33 = vector.load %arg3[%c4, %c0_27, %c0_28] : memref<49x4x128xbf16, #tpu.memory_space<vmem>>, vector<1x4x128xbf16>
    %34 = vector.shape_cast %33 : vector<1x4x128xbf16> to vector<4x128xbf16>
    %cst_29 = arith.constant dense<0.000000e+00> : vector<8x128xf32>
    %35 = tpu.matmul %32, %34, %cst_29 {dimension_numbers = #tpu.dot_dimension_numbers<[1], [0], [0], [1], [0, 0, 1, 1], [], []>} : vector<8x4xbf16>, vector<4x128xbf16>, vector<8x128xf32> -> vector<8x128xf32>
    %36 = arith.addf %29, %35 : vector<8x128xf32>
    %c1_30 = arith.constant 1 : index
    %37 = arith.index_cast %1 : i32 to index
    %c2_31 = arith.constant 2 : index
    %c0_32 = arith.constant 0 : index
    %38 = vector.load %arg2[%c1_30, %37, %c2_31, %c0_32] : memref<4x11x11x4xbf16, #tpu.memory_space<vmem>>, vector<1x1x8x4xbf16>
    %39 = vector.shape_cast %38 : vector<1x1x8x4xbf16> to vector<8x4xbf16>
    %c5 = arith.constant 5 : index
    %c0_33 = arith.constant 0 : index
    %c0_34 = arith.constant 0 : index
    %40 = vector.load %arg3[%c5, %c0_33, %c0_34] : memref<49x4x128xbf16, #tpu.memory_space<vmem>>, vector<1x4x128xbf16>
    %41 = vector.shape_cast %40 : vector<1x4x128xbf16> to vector<4x128xbf16>
    %cst_35 = arith.constant dense<0.000000e+00> : vector<8x128xf32>
    %42 = tpu.matmul %39, %41, %cst_35 {dimension_numbers = #tpu.dot_dimension_numbers<[1], [0], [0], [1], [0, 0, 1, 1], [], []>} : vector<8x4xbf16>, vector<4x128xbf16>, vector<8x128xf32> -> vector<8x128xf32>
    %43 = arith.addf %36, %42 : vector<8x128xf32>
    %c0_36 = arith.constant 0 : index
    %44 = arith.index_cast %1 : i32 to index
    %c3_37 = arith.constant 3 : index
    %c0_38 = arith.constant 0 : index
    %45 = vector.load %arg2[%c0_36, %44, %c3_37, %c0_38] : memref<4x11x11x4xbf16, #tpu.memory_space<vmem>>, vector<1x1x8x4xbf16>
    %46 = vector.shape_cast %45 : vector<1x1x8x4xbf16> to vector<8x4xbf16>
    %c6 = arith.constant 6 : index
    %c0_39 = arith.constant 0 : index
    %c0_40 = arith.constant 0 : index
    %47 = vector.load %arg3[%c6, %c0_39, %c0_40] : memref<49x4x128xbf16, #tpu.memory_space<vmem>>, vector<1x4x128xbf16>
    %48 = vector.shape_cast %47 : vector<1x4x128xbf16> to vector<4x128xbf16>
    %cst_41 = arith.constant dense<0.000000e+00> : vector<8x128xf32>
    %49 = tpu.matmul %46, %48, %cst_41 {dimension_numbers = #tpu.dot_dimension_numbers<[1], [0], [0], [1], [0, 0, 1, 1], [], []>} : vector<8x4xbf16>, vector<4x128xbf16>, vector<8x128xf32> -> vector<8x128xf32>
    %50 = arith.addf %43, %49 : vector<8x128xf32>
    %c0_i32_42 = arith.constant 0 : i32
    %51 = arith.addi %arg1, %c0_i32_42 : i32
    %c2_43 = arith.constant 2 : index
    %52 = arith.index_cast %51 : i32 to index
    %c0_44 = arith.constant 0 : index
    %c0_45 = arith.constant 0 : index
    %53 = vector.load %arg2[%c2_43, %52, %c0_44, %c0_45] : memref<4x11x11x4xbf16, #tpu.memory_space<vmem>>, vector<1x1x8x4xbf16>
    %54 = vector.shape_cast %53 : vector<1x1x8x4xbf16> to vector<8x4xbf16>
    %c7 = arith.constant 7 : index
    %c0_46 = arith.constant 0 : index
    %c0_47 = arith.constant 0 : index
    %55 = vector.load %arg3[%c7, %c0_46, %c0_47] : memref<49x4x128xbf16, #tpu.memory_space<vmem>>, vector<1x4x128xbf16>
    %56 = vector.shape_cast %55 : vector<1x4x128xbf16> to vector<4x128xbf16>
    %cst_48 = arith.constant dense<0.000000e+00> : vector<8x128xf32>
    %57 = tpu.matmul %54, %56, %cst_48 {dimension_numbers = #tpu.dot_dimension_numbers<[1], [0], [0], [1], [0, 0, 1, 1], [], []>} : vector<8x4xbf16>, vector<4x128xbf16>, vector<8x128xf32> -> vector<8x128xf32>
    %58 = arith.addf %50, %57 : vector<8x128xf32>
    %c3_49 = arith.constant 3 : index
    %59 = arith.index_cast %51 : i32 to index
    %c0_50 = arith.constant 0 : index
    %c0_51 = arith.constant 0 : index
    %60 = vector.load %arg2[%c3_49, %59, %c0_50, %c0_51] : memref<4x11x11x4xbf16, #tpu.memory_space<vmem>>, vector<1x1x8x4xbf16>
    %61 = vector.shape_cast %60 : vector<1x1x8x4xbf16> to vector<8x4xbf16>
    %c8 = arith.constant 8 : index
    %c0_52 = arith.constant 0 : index
    %c0_53 = arith.constant 0 : index
    %62 = vector.load %arg3[%c8, %c0_52, %c0_53] : memref<49x4x128xbf16, #tpu.memory_space<vmem>>, vector<1x4x128xbf16>
    %63 = vector.shape_cast %62 : vector<1x4x128xbf16> to vector<4x128xbf16>
    %cst_54 = arith.constant dense<0.000000e+00> : vector<8x128xf32>
    %64 = tpu.matmul %61, %63, %cst_54 {dimension_numbers = #tpu.dot_dimension_numbers<[1], [0], [0], [1], [0, 0, 1, 1], [], []>} : vector<8x4xbf16>, vector<4x128xbf16>, vector<8x128xf32> -> vector<8x128xf32>
    %65 = arith.addf %58, %64 : vector<8x128xf32>
    %c2_55 = arith.constant 2 : index
    %66 = arith.index_cast %51 : i32 to index
    %c1_56 = arith.constant 1 : index
    %c0_57 = arith.constant 0 : index
    %67 = vector.load %arg2[%c2_55, %66, %c1_56, %c0_57] : memref<4x11x11x4xbf16, #tpu.memory_space<vmem>>, vector<1x1x8x4xbf16>
    %68 = vector.shape_cast %67 : vector<1x1x8x4xbf16> to vector<8x4xbf16>
    %c9 = arith.constant 9 : index
    %c0_58 = arith.constant 0 : index
    %c0_59 = arith.constant 0 : index
    %69 = vector.load %arg3[%c9, %c0_58, %c0_59] : memref<49x4x128xbf16, #tpu.memory_space<vmem>>, vector<1x4x128xbf16>
    %70 = vector.shape_cast %69 : vector<1x4x128xbf16> to vector<4x128xbf16>
    %cst_60 = arith.constant dense<0.000000e+00> : vector<8x128xf32>
    %71 = tpu.matmul %68, %70, %cst_60 {dimension_numbers = #tpu.dot_dimension_numbers<[1], [0], [0], [1], [0, 0, 1, 1], [], []>} : vector<8x4xbf16>, vector<4x128xbf16>, vector<8x128xf32> -> vector<8x128xf32>
    %72 = arith.addf %65, %71 : vector<8x128xf32>
    %c3_61 = arith.constant 3 : index
    %73 = arith.index_cast %51 : i32 to index
    %c1_62 = arith.constant 1 : index
    %c0_63 = arith.constant 0 : index
    %74 = vector.load %arg2[%c3_61, %73, %c1_62, %c0_63] : memref<4x11x11x4xbf16, #tpu.memory_space<vmem>>, vector<1x1x8x4xbf16>
    %75 = vector.shape_cast %74 : vector<1x1x8x4xbf16> to vector<8x4xbf16>
    %c10 = arith.constant 10 : index
    %c0_64 = arith.constant 0 : index
    %c0_65 = arith.constant 0 : index
    %76 = vector.load %arg3[%c10, %c0_64, %c0_65] : memref<49x4x128xbf16, #tpu.memory_space<vmem>>, vector<1x4x128xbf16>
    %77 = vector.shape_cast %76 : vector<1x4x128xbf16> to vector<4x128xbf16>
    %cst_66 = arith.constant dense<0.000000e+00> : vector<8x128xf32>
    %78 = tpu.matmul %75, %77, %cst_66 {dimension_numbers = #tpu.dot_dimension_numbers<[1], [0], [0], [1], [0, 0, 1, 1], [], []>} : vector<8x4xbf16>, vector<4x128xbf16>, vector<8x128xf32> -> vector<8x128xf32>
    %79 = arith.addf %72, %78 : vector<8x128xf32>
    %c2_67 = arith.constant 2 : index
    %80 = arith.index_cast %51 : i32 to index
    %c2_68 = arith.constant 2 : index
    %c0_69 = arith.constant 0 : index
    %81 = vector.load %arg2[%c2_67, %80, %c2_68, %c0_69] : memref<4x11x11x4xbf16, #tpu.memory_space<vmem>>, vector<1x1x8x4xbf16>
    %82 = vector.shape_cast %81 : vector<1x1x8x4xbf16> to vector<8x4xbf16>
    %c11 = arith.constant 11 : index
    %c0_70 = arith.constant 0 : index
    %c0_71 = arith.constant 0 : index
    %83 = vector.load %arg3[%c11, %c0_70, %c0_71] : memref<49x4x128xbf16, #tpu.memory_space<vmem>>, vector<1x4x128xbf16>
    %84 = vector.shape_cast %83 : vector<1x4x128xbf16> to vector<4x128xbf16>
    %cst_72 = arith.constant dense<0.000000e+00> : vector<8x128xf32>
    %85 = tpu.matmul %82, %84, %cst_72 {dimension_numbers = #tpu.dot_dimension_numbers<[1], [0], [0], [1], [0, 0, 1, 1], [], []>} : vector<8x4xbf16>, vector<4x128xbf16>, vector<8x128xf32> -> vector<8x128xf32>
    %86 = arith.addf %79, %85 : vector<8x128xf32>
    %c3_73 = arith.constant 3 : index
    %87 = arith.index_cast %51 : i32 to index
    %c2_74 = arith.constant 2 : index
    %c0_75 = arith.constant 0 : index
    %88 = vector.load %arg2[%c3_73, %87, %c2_74, %c0_75] : memref<4x11x11x4xbf16, #tpu.memory_space<vmem>>, vector<1x1x8x4xbf16>
    %89 = vector.shape_cast %88 : vector<1x1x8x4xbf16> to vector<8x4xbf16>
    %c12 = arith.constant 12 : index
    %c0_76 = arith.constant 0 : index
    %c0_77 = arith.constant 0 : index
    %90 = vector.load %arg3[%c12, %c0_76, %c0_77] : memref<49x4x128xbf16, #tpu.memory_space<vmem>>, vector<1x4x128xbf16>
    %91 = vector.shape_cast %90 : vector<1x4x128xbf16> to vector<4x128xbf16>
    %cst_78 = arith.constant dense<0.000000e+00> : vector<8x128xf32>
    %92 = tpu.matmul %89, %91, %cst_78 {dimension_numbers = #tpu.dot_dimension_numbers<[1], [0], [0], [1], [0, 0, 1, 1], [], []>} : vector<8x4xbf16>, vector<4x128xbf16>, vector<8x128xf32> -> vector<8x128xf32>
    %93 = arith.addf %86, %92 : vector<8x128xf32>
    %c2_79 = arith.constant 2 : index
    %94 = arith.index_cast %51 : i32 to index
    %c3_80 = arith.constant 3 : index
    %c0_81 = arith.constant 0 : index
    %95 = vector.load %arg2[%c2_79, %94, %c3_80, %c0_81] : memref<4x11x11x4xbf16, #tpu.memory_space<vmem>>, vector<1x1x8x4xbf16>
    %96 = vector.shape_cast %95 : vector<1x1x8x4xbf16> to vector<8x4xbf16>
    %c13 = arith.constant 13 : index
    %c0_82 = arith.constant 0 : index
    %c0_83 = arith.constant 0 : index
    %97 = vector.load %arg3[%c13, %c0_82, %c0_83] : memref<49x4x128xbf16, #tpu.memory_space<vmem>>, vector<1x4x128xbf16>
    %98 = vector.shape_cast %97 : vector<1x4x128xbf16> to vector<4x128xbf16>
    %cst_84 = arith.constant dense<0.000000e+00> : vector<8x128xf32>
    %99 = tpu.matmul %96, %98, %cst_84 {dimension_numbers = #tpu.dot_dimension_numbers<[1], [0], [0], [1], [0, 0, 1, 1], [], []>} : vector<8x4xbf16>, vector<4x128xbf16>, vector<8x128xf32> -> vector<8x128xf32>
    %100 = arith.addf %93, %99 : vector<8x128xf32>
    %c1_i32 = arith.constant 1 : i32
    %101 = arith.addi %arg1, %c1_i32 : i32
    %c0_85 = arith.constant 0 : index
    %102 = arith.index_cast %101 : i32 to index
    %c0_86 = arith.constant 0 : index
    %c0_87 = arith.constant 0 : index
    %103 = vector.load %arg2[%c0_85, %102, %c0_86, %c0_87] : memref<4x11x11x4xbf16, #tpu.memory_space<vmem>>, vector<1x1x8x4xbf16>
    %104 = vector.shape_cast %103 : vector<1x1x8x4xbf16> to vector<8x4xbf16>
    %c14 = arith.constant 14 : index
    %c0_88 = arith.constant 0 : index
    %c0_89 = arith.constant 0 : index
    %105 = vector.load %arg3[%c14, %c0_88, %c0_89] : memref<49x4x128xbf16, #tpu.memory_space<vmem>>, vector<1x4x128xbf16>
    %106 = vector.shape_cast %105 : vector<1x4x128xbf16> to vector<4x128xbf16>
    %cst_90 = arith.constant dense<0.000000e+00> : vector<8x128xf32>
    %107 = tpu.matmul %104, %106, %cst_90 {dimension_numbers = #tpu.dot_dimension_numbers<[1], [0], [0], [1], [0, 0, 1, 1], [], []>} : vector<8x4xbf16>, vector<4x128xbf16>, vector<8x128xf32> -> vector<8x128xf32>
    %108 = arith.addf %100, %107 : vector<8x128xf32>
    %c1_91 = arith.constant 1 : index
    %109 = arith.index_cast %101 : i32 to index
    %c0_92 = arith.constant 0 : index
    %c0_93 = arith.constant 0 : index
    %110 = vector.load %arg2[%c1_91, %109, %c0_92, %c0_93] : memref<4x11x11x4xbf16, #tpu.memory_space<vmem>>, vector<1x1x8x4xbf16>
    %111 = vector.shape_cast %110 : vector<1x1x8x4xbf16> to vector<8x4xbf16>
    %c15 = arith.constant 15 : index
    %c0_94 = arith.constant 0 : index
    %c0_95 = arith.constant 0 : index
    %112 = vector.load %arg3[%c15, %c0_94, %c0_95] : memref<49x4x128xbf16, #tpu.memory_space<vmem>>, vector<1x4x128xbf16>
    %113 = vector.shape_cast %112 : vector<1x4x128xbf16> to vector<4x128xbf16>
    %cst_96 = arith.constant dense<0.000000e+00> : vector<8x128xf32>
    %114 = tpu.matmul %111, %113, %cst_96 {dimension_numbers = #tpu.dot_dimension_numbers<[1], [0], [0], [1], [0, 0, 1, 1], [], []>} : vector<8x4xbf16>, vector<4x128xbf16>, vector<8x128xf32> -> vector<8x128xf32>
    %115 = arith.addf %108, %114 : vector<8x128xf32>
    %c0_97 = arith.constant 0 : index
    %116 = arith.index_cast %101 : i32 to index
    %c1_98 = arith.constant 1 : index
    %c0_99 = arith.constant 0 : index
    %117 = vector.load %arg2[%c0_97, %116, %c1_98, %c0_99] : memref<4x11x11x4xbf16, #tpu.memory_space<vmem>>, vector<1x1x8x4xbf16>
    %118 = vector.shape_cast %117 : vector<1x1x8x4xbf16> to vector<8x4xbf16>
    %c16 = arith.constant 16 : index
    %c0_100 = arith.constant 0 : index
    %c0_101 = arith.constant 0 : index
    %119 = vector.load %arg3[%c16, %c0_100, %c0_101] : memref<49x4x128xbf16, #tpu.memory_space<vmem>>, vector<1x4x128xbf16>
    %120 = vector.shape_cast %119 : vector<1x4x128xbf16> to vector<4x128xbf16>
    %cst_102 = arith.constant dense<0.000000e+00> : vector<8x128xf32>
    %121 = tpu.matmul %118, %120, %cst_102 {dimension_numbers = #tpu.dot_dimension_numbers<[1], [0], [0], [1], [0, 0, 1, 1], [], []>} : vector<8x4xbf16>, vector<4x128xbf16>, vector<8x128xf32> -> vector<8x128xf32>
    %122 = arith.addf %115, %121 : vector<8x128xf32>
    %c1_103 = arith.constant 1 : index
    %123 = arith.index_cast %101 : i32 to index
    %c1_104 = arith.constant 1 : index
    %c0_105 = arith.constant 0 : index
    %124 = vector.load %arg2[%c1_103, %123, %c1_104, %c0_105] : memref<4x11x11x4xbf16, #tpu.memory_space<vmem>>, vector<1x1x8x4xbf16>
    %125 = vector.shape_cast %124 : vector<1x1x8x4xbf16> to vector<8x4xbf16>
    %c17 = arith.constant 17 : index
    %c0_106 = arith.constant 0 : index
    %c0_107 = arith.constant 0 : index
    %126 = vector.load %arg3[%c17, %c0_106, %c0_107] : memref<49x4x128xbf16, #tpu.memory_space<vmem>>, vector<1x4x128xbf16>
    %127 = vector.shape_cast %126 : vector<1x4x128xbf16> to vector<4x128xbf16>
    %cst_108 = arith.constant dense<0.000000e+00> : vector<8x128xf32>
    %128 = tpu.matmul %125, %127, %cst_108 {dimension_numbers = #tpu.dot_dimension_numbers<[1], [0], [0], [1], [0, 0, 1, 1], [], []>} : vector<8x4xbf16>, vector<4x128xbf16>, vector<8x128xf32> -> vector<8x128xf32>
    %129 = arith.addf %122, %128 : vector<8x128xf32>
    %c0_109 = arith.constant 0 : index
    %130 = arith.index_cast %101 : i32 to index
    %c2_110 = arith.constant 2 : index
    %c0_111 = arith.constant 0 : index
    %131 = vector.load %arg2[%c0_109, %130, %c2_110, %c0_111] : memref<4x11x11x4xbf16, #tpu.memory_space<vmem>>, vector<1x1x8x4xbf16>
    %132 = vector.shape_cast %131 : vector<1x1x8x4xbf16> to vector<8x4xbf16>
    %c18 = arith.constant 18 : index
    %c0_112 = arith.constant 0 : index
    %c0_113 = arith.constant 0 : index
    %133 = vector.load %arg3[%c18, %c0_112, %c0_113] : memref<49x4x128xbf16, #tpu.memory_space<vmem>>, vector<1x4x128xbf16>
    %134 = vector.shape_cast %133 : vector<1x4x128xbf16> to vector<4x128xbf16>
    %cst_114 = arith.constant dense<0.000000e+00> : vector<8x128xf32>
    %135 = tpu.matmul %132, %134, %cst_114 {dimension_numbers = #tpu.dot_dimension_numbers<[1], [0], [0], [1], [0, 0, 1, 1], [], []>} : vector<8x4xbf16>, vector<4x128xbf16>, vector<8x128xf32> -> vector<8x128xf32>
    %136 = arith.addf %129, %135 : vector<8x128xf32>
    %c1_115 = arith.constant 1 : index
    %137 = arith.index_cast %101 : i32 to index
    %c2_116 = arith.constant 2 : index
    %c0_117 = arith.constant 0 : index
    %138 = vector.load %arg2[%c1_115, %137, %c2_116, %c0_117] : memref<4x11x11x4xbf16, #tpu.memory_space<vmem>>, vector<1x1x8x4xbf16>
    %139 = vector.shape_cast %138 : vector<1x1x8x4xbf16> to vector<8x4xbf16>
    %c19 = arith.constant 19 : index
    %c0_118 = arith.constant 0 : index
    %c0_119 = arith.constant 0 : index
    %140 = vector.load %arg3[%c19, %c0_118, %c0_119] : memref<49x4x128xbf16, #tpu.memory_space<vmem>>, vector<1x4x128xbf16>
    %141 = vector.shape_cast %140 : vector<1x4x128xbf16> to vector<4x128xbf16>
    %cst_120 = arith.constant dense<0.000000e+00> : vector<8x128xf32>
    %142 = tpu.matmul %139, %141, %cst_120 {dimension_numbers = #tpu.dot_dimension_numbers<[1], [0], [0], [1], [0, 0, 1, 1], [], []>} : vector<8x4xbf16>, vector<4x128xbf16>, vector<8x128xf32> -> vector<8x128xf32>
    %143 = arith.addf %136, %142 : vector<8x128xf32>
    %c0_121 = arith.constant 0 : index
    %144 = arith.index_cast %101 : i32 to index
    %c3_122 = arith.constant 3 : index
    %c0_123 = arith.constant 0 : index
    %145 = vector.load %arg2[%c0_121, %144, %c3_122, %c0_123] : memref<4x11x11x4xbf16, #tpu.memory_space<vmem>>, vector<1x1x8x4xbf16>
    %146 = vector.shape_cast %145 : vector<1x1x8x4xbf16> to vector<8x4xbf16>
    %c20 = arith.constant 20 : index
    %c0_124 = arith.constant 0 : index
    %c0_125 = arith.constant 0 : index
    %147 = vector.load %arg3[%c20, %c0_124, %c0_125] : memref<49x4x128xbf16, #tpu.memory_space<vmem>>, vector<1x4x128xbf16>
    %148 = vector.shape_cast %147 : vector<1x4x128xbf16> to vector<4x128xbf16>
    %cst_126 = arith.constant dense<0.000000e+00> : vector<8x128xf32>
    %149 = tpu.matmul %146, %148, %cst_126 {dimension_numbers = #tpu.dot_dimension_numbers<[1], [0], [0], [1], [0, 0, 1, 1], [], []>} : vector<8x4xbf16>, vector<4x128xbf16>, vector<8x128xf32> -> vector<8x128xf32>
    %150 = arith.addf %143, %149 : vector<8x128xf32>
    %c1_i32_127 = arith.constant 1 : i32
    %151 = arith.addi %arg1, %c1_i32_127 : i32
    %c2_128 = arith.constant 2 : index
    %152 = arith.index_cast %151 : i32 to index
    %c0_129 = arith.constant 0 : index
    %c0_130 = arith.constant 0 : index
    %153 = vector.load %arg2[%c2_128, %152, %c0_129, %c0_130] : memref<4x11x11x4xbf16, #tpu.memory_space<vmem>>, vector<1x1x8x4xbf16>
    %154 = vector.shape_cast %153 : vector<1x1x8x4xbf16> to vector<8x4xbf16>
    %c21 = arith.constant 21 : index
    %c0_131 = arith.constant 0 : index
    %c0_132 = arith.constant 0 : index
    %155 = vector.load %arg3[%c21, %c0_131, %c0_132] : memref<49x4x128xbf16, #tpu.memory_space<vmem>>, vector<1x4x128xbf16>
    %156 = vector.shape_cast %155 : vector<1x4x128xbf16> to vector<4x128xbf16>
    %cst_133 = arith.constant dense<0.000000e+00> : vector<8x128xf32>
    %157 = tpu.matmul %154, %156, %cst_133 {dimension_numbers = #tpu.dot_dimension_numbers<[1], [0], [0], [1], [0, 0, 1, 1], [], []>} : vector<8x4xbf16>, vector<4x128xbf16>, vector<8x128xf32> -> vector<8x128xf32>
    %158 = arith.addf %150, %157 : vector<8x128xf32>
    %c3_134 = arith.constant 3 : index
    %159 = arith.index_cast %151 : i32 to index
    %c0_135 = arith.constant 0 : index
    %c0_136 = arith.constant 0 : index
    %160 = vector.load %arg2[%c3_134, %159, %c0_135, %c0_136] : memref<4x11x11x4xbf16, #tpu.memory_space<vmem>>, vector<1x1x8x4xbf16>
    %161 = vector.shape_cast %160 : vector<1x1x8x4xbf16> to vector<8x4xbf16>
    %c22 = arith.constant 22 : index
    %c0_137 = arith.constant 0 : index
    %c0_138 = arith.constant 0 : index
    %162 = vector.load %arg3[%c22, %c0_137, %c0_138] : memref<49x4x128xbf16, #tpu.memory_space<vmem>>, vector<1x4x128xbf16>
    %163 = vector.shape_cast %162 : vector<1x4x128xbf16> to vector<4x128xbf16>
    %cst_139 = arith.constant dense<0.000000e+00> : vector<8x128xf32>
    %164 = tpu.matmul %161, %163, %cst_139 {dimension_numbers = #tpu.dot_dimension_numbers<[1], [0], [0], [1], [0, 0, 1, 1], [], []>} : vector<8x4xbf16>, vector<4x128xbf16>, vector<8x128xf32> -> vector<8x128xf32>
    %165 = arith.addf %158, %164 : vector<8x128xf32>
    %c2_140 = arith.constant 2 : index
    %166 = arith.index_cast %151 : i32 to index
    %c1_141 = arith.constant 1 : index
    %c0_142 = arith.constant 0 : index
    %167 = vector.load %arg2[%c2_140, %166, %c1_141, %c0_142] : memref<4x11x11x4xbf16, #tpu.memory_space<vmem>>, vector<1x1x8x4xbf16>
    %168 = vector.shape_cast %167 : vector<1x1x8x4xbf16> to vector<8x4xbf16>
    %c23 = arith.constant 23 : index
    %c0_143 = arith.constant 0 : index
    %c0_144 = arith.constant 0 : index
    %169 = vector.load %arg3[%c23, %c0_143, %c0_144] : memref<49x4x128xbf16, #tpu.memory_space<vmem>>, vector<1x4x128xbf16>
    %170 = vector.shape_cast %169 : vector<1x4x128xbf16> to vector<4x128xbf16>
    %cst_145 = arith.constant dense<0.000000e+00> : vector<8x128xf32>
    %171 = tpu.matmul %168, %170, %cst_145 {dimension_numbers = #tpu.dot_dimension_numbers<[1], [0], [0], [1], [0, 0, 1, 1], [], []>} : vector<8x4xbf16>, vector<4x128xbf16>, vector<8x128xf32> -> vector<8x128xf32>
    %172 = arith.addf %165, %171 : vector<8x128xf32>
    %c3_146 = arith.constant 3 : index
    %173 = arith.index_cast %151 : i32 to index
    %c1_147 = arith.constant 1 : index
    %c0_148 = arith.constant 0 : index
    %174 = vector.load %arg2[%c3_146, %173, %c1_147, %c0_148] : memref<4x11x11x4xbf16, #tpu.memory_space<vmem>>, vector<1x1x8x4xbf16>
    %175 = vector.shape_cast %174 : vector<1x1x8x4xbf16> to vector<8x4xbf16>
    %c24 = arith.constant 24 : index
    %c0_149 = arith.constant 0 : index
    %c0_150 = arith.constant 0 : index
    %176 = vector.load %arg3[%c24, %c0_149, %c0_150] : memref<49x4x128xbf16, #tpu.memory_space<vmem>>, vector<1x4x128xbf16>
    %177 = vector.shape_cast %176 : vector<1x4x128xbf16> to vector<4x128xbf16>
    %cst_151 = arith.constant dense<0.000000e+00> : vector<8x128xf32>
    %178 = tpu.matmul %175, %177, %cst_151 {dimension_numbers = #tpu.dot_dimension_numbers<[1], [0], [0], [1], [0, 0, 1, 1], [], []>} : vector<8x4xbf16>, vector<4x128xbf16>, vector<8x128xf32> -> vector<8x128xf32>
    %179 = arith.addf %172, %178 : vector<8x128xf32>
    %c2_152 = arith.constant 2 : index
    %180 = arith.index_cast %151 : i32 to index
    %c2_153 = arith.constant 2 : index
    %c0_154 = arith.constant 0 : index
    %181 = vector.load %arg2[%c2_152, %180, %c2_153, %c0_154] : memref<4x11x11x4xbf16, #tpu.memory_space<vmem>>, vector<1x1x8x4xbf16>
    %182 = vector.shape_cast %181 : vector<1x1x8x4xbf16> to vector<8x4xbf16>
    %c25 = arith.constant 25 : index
    %c0_155 = arith.constant 0 : index
    %c0_156 = arith.constant 0 : index
    %183 = vector.load %arg3[%c25, %c0_155, %c0_156] : memref<49x4x128xbf16, #tpu.memory_space<vmem>>, vector<1x4x128xbf16>
    %184 = vector.shape_cast %183 : vector<1x4x128xbf16> to vector<4x128xbf16>
    %cst_157 = arith.constant dense<0.000000e+00> : vector<8x128xf32>
    %185 = tpu.matmul %182, %184, %cst_157 {dimension_numbers = #tpu.dot_dimension_numbers<[1], [0], [0], [1], [0, 0, 1, 1], [], []>} : vector<8x4xbf16>, vector<4x128xbf16>, vector<8x128xf32> -> vector<8x128xf32>
    %186 = arith.addf %179, %185 : vector<8x128xf32>
    %c3_158 = arith.constant 3 : index
    %187 = arith.index_cast %151 : i32 to index
    %c2_159 = arith.constant 2 : index
    %c0_160 = arith.constant 0 : index
    %188 = vector.load %arg2[%c3_158, %187, %c2_159, %c0_160] : memref<4x11x11x4xbf16, #tpu.memory_space<vmem>>, vector<1x1x8x4xbf16>
    %189 = vector.shape_cast %188 : vector<1x1x8x4xbf16> to vector<8x4xbf16>
    %c26 = arith.constant 26 : index
    %c0_161 = arith.constant 0 : index
    %c0_162 = arith.constant 0 : index
    %190 = vector.load %arg3[%c26, %c0_161, %c0_162] : memref<49x4x128xbf16, #tpu.memory_space<vmem>>, vector<1x4x128xbf16>
    %191 = vector.shape_cast %190 : vector<1x4x128xbf16> to vector<4x128xbf16>
    %cst_163 = arith.constant dense<0.000000e+00> : vector<8x128xf32>
    %192 = tpu.matmul %189, %191, %cst_163 {dimension_numbers = #tpu.dot_dimension_numbers<[1], [0], [0], [1], [0, 0, 1, 1], [], []>} : vector<8x4xbf16>, vector<4x128xbf16>, vector<8x128xf32> -> vector<8x128xf32>
    %193 = arith.addf %186, %192 : vector<8x128xf32>
    %c2_164 = arith.constant 2 : index
    %194 = arith.index_cast %151 : i32 to index
    %c3_165 = arith.constant 3 : index
    %c0_166 = arith.constant 0 : index
    %195 = vector.load %arg2[%c2_164, %194, %c3_165, %c0_166] : memref<4x11x11x4xbf16, #tpu.memory_space<vmem>>, vector<1x1x8x4xbf16>
    %196 = vector.shape_cast %195 : vector<1x1x8x4xbf16> to vector<8x4xbf16>
    %c27 = arith.constant 27 : index
    %c0_167 = arith.constant 0 : index
    %c0_168 = arith.constant 0 : index
    %197 = vector.load %arg3[%c27, %c0_167, %c0_168] : memref<49x4x128xbf16, #tpu.memory_space<vmem>>, vector<1x4x128xbf16>
    %198 = vector.shape_cast %197 : vector<1x4x128xbf16> to vector<4x128xbf16>
    %cst_169 = arith.constant dense<0.000000e+00> : vector<8x128xf32>
    %199 = tpu.matmul %196, %198, %cst_169 {dimension_numbers = #tpu.dot_dimension_numbers<[1], [0], [0], [1], [0, 0, 1, 1], [], []>} : vector<8x4xbf16>, vector<4x128xbf16>, vector<8x128xf32> -> vector<8x128xf32>
    %200 = arith.addf %193, %199 : vector<8x128xf32>
    %c2_i32 = arith.constant 2 : i32
    %201 = arith.addi %arg1, %c2_i32 : i32
    %c0_170 = arith.constant 0 : index
    %202 = arith.index_cast %201 : i32 to index
    %c0_171 = arith.constant 0 : index
    %c0_172 = arith.constant 0 : index
    %203 = vector.load %arg2[%c0_170, %202, %c0_171, %c0_172] : memref<4x11x11x4xbf16, #tpu.memory_space<vmem>>, vector<1x1x8x4xbf16>
    %204 = vector.shape_cast %203 : vector<1x1x8x4xbf16> to vector<8x4xbf16>
    %c28 = arith.constant 28 : index
    %c0_173 = arith.constant 0 : index
    %c0_174 = arith.constant 0 : index
    %205 = vector.load %arg3[%c28, %c0_173, %c0_174] : memref<49x4x128xbf16, #tpu.memory_space<vmem>>, vector<1x4x128xbf16>
    %206 = vector.shape_cast %205 : vector<1x4x128xbf16> to vector<4x128xbf16>
    %cst_175 = arith.constant dense<0.000000e+00> : vector<8x128xf32>
    %207 = tpu.matmul %204, %206, %cst_175 {dimension_numbers = #tpu.dot_dimension_numbers<[1], [0], [0], [1], [0, 0, 1, 1], [], []>} : vector<8x4xbf16>, vector<4x128xbf16>, vector<8x128xf32> -> vector<8x128xf32>
    %208 = arith.addf %200, %207 : vector<8x128xf32>
    %c1_176 = arith.constant 1 : index
    %209 = arith.index_cast %201 : i32 to index
    %c0_177 = arith.constant 0 : index
    %c0_178 = arith.constant 0 : index
    %210 = vector.load %arg2[%c1_176, %209, %c0_177, %c0_178] : memref<4x11x11x4xbf16, #tpu.memory_space<vmem>>, vector<1x1x8x4xbf16>
    %211 = vector.shape_cast %210 : vector<1x1x8x4xbf16> to vector<8x4xbf16>
    %c29 = arith.constant 29 : index
    %c0_179 = arith.constant 0 : index
    %c0_180 = arith.constant 0 : index
    %212 = vector.load %arg3[%c29, %c0_179, %c0_180] : memref<49x4x128xbf16, #tpu.memory_space<vmem>>, vector<1x4x128xbf16>
    %213 = vector.shape_cast %212 : vector<1x4x128xbf16> to vector<4x128xbf16>
    %cst_181 = arith.constant dense<0.000000e+00> : vector<8x128xf32>
    %214 = tpu.matmul %211, %213, %cst_181 {dimension_numbers = #tpu.dot_dimension_numbers<[1], [0], [0], [1], [0, 0, 1, 1], [], []>} : vector<8x4xbf16>, vector<4x128xbf16>, vector<8x128xf32> -> vector<8x128xf32>
    %215 = arith.addf %208, %214 : vector<8x128xf32>
    %c0_182 = arith.constant 0 : index
    %216 = arith.index_cast %201 : i32 to index
    %c1_183 = arith.constant 1 : index
    %c0_184 = arith.constant 0 : index
    %217 = vector.load %arg2[%c0_182, %216, %c1_183, %c0_184] : memref<4x11x11x4xbf16, #tpu.memory_space<vmem>>, vector<1x1x8x4xbf16>
    %218 = vector.shape_cast %217 : vector<1x1x8x4xbf16> to vector<8x4xbf16>
    %c30 = arith.constant 30 : index
    %c0_185 = arith.constant 0 : index
    %c0_186 = arith.constant 0 : index
    %219 = vector.load %arg3[%c30, %c0_185, %c0_186] : memref<49x4x128xbf16, #tpu.memory_space<vmem>>, vector<1x4x128xbf16>
    %220 = vector.shape_cast %219 : vector<1x4x128xbf16> to vector<4x128xbf16>
    %cst_187 = arith.constant dense<0.000000e+00> : vector<8x128xf32>
    %221 = tpu.matmul %218, %220, %cst_187 {dimension_numbers = #tpu.dot_dimension_numbers<[1], [0], [0], [1], [0, 0, 1, 1], [], []>} : vector<8x4xbf16>, vector<4x128xbf16>, vector<8x128xf32> -> vector<8x128xf32>
    %222 = arith.addf %215, %221 : vector<8x128xf32>
    %c1_188 = arith.constant 1 : index
    %223 = arith.index_cast %201 : i32 to index
    %c1_189 = arith.constant 1 : index
    %c0_190 = arith.constant 0 : index
    %224 = vector.load %arg2[%c1_188, %223, %c1_189, %c0_190] : memref<4x11x11x4xbf16, #tpu.memory_space<vmem>>, vector<1x1x8x4xbf16>
    %225 = vector.shape_cast %224 : vector<1x1x8x4xbf16> to vector<8x4xbf16>
    %c31 = arith.constant 31 : index
    %c0_191 = arith.constant 0 : index
    %c0_192 = arith.constant 0 : index
    %226 = vector.load %arg3[%c31, %c0_191, %c0_192] : memref<49x4x128xbf16, #tpu.memory_space<vmem>>, vector<1x4x128xbf16>
    %227 = vector.shape_cast %226 : vector<1x4x128xbf16> to vector<4x128xbf16>
    %cst_193 = arith.constant dense<0.000000e+00> : vector<8x128xf32>
    %228 = tpu.matmul %225, %227, %cst_193 {dimension_numbers = #tpu.dot_dimension_numbers<[1], [0], [0], [1], [0, 0, 1, 1], [], []>} : vector<8x4xbf16>, vector<4x128xbf16>, vector<8x128xf32> -> vector<8x128xf32>
    %229 = arith.addf %222, %228 : vector<8x128xf32>
    %c0_194 = arith.constant 0 : index
    %230 = arith.index_cast %201 : i32 to index
    %c2_195 = arith.constant 2 : index
    %c0_196 = arith.constant 0 : index
    %231 = vector.load %arg2[%c0_194, %230, %c2_195, %c0_196] : memref<4x11x11x4xbf16, #tpu.memory_space<vmem>>, vector<1x1x8x4xbf16>
    %232 = vector.shape_cast %231 : vector<1x1x8x4xbf16> to vector<8x4xbf16>
    %c32 = arith.constant 32 : index
    %c0_197 = arith.constant 0 : index
    %c0_198 = arith.constant 0 : index
    %233 = vector.load %arg3[%c32, %c0_197, %c0_198] : memref<49x4x128xbf16, #tpu.memory_space<vmem>>, vector<1x4x128xbf16>
    %234 = vector.shape_cast %233 : vector<1x4x128xbf16> to vector<4x128xbf16>
    %cst_199 = arith.constant dense<0.000000e+00> : vector<8x128xf32>
    %235 = tpu.matmul %232, %234, %cst_199 {dimension_numbers = #tpu.dot_dimension_numbers<[1], [0], [0], [1], [0, 0, 1, 1], [], []>} : vector<8x4xbf16>, vector<4x128xbf16>, vector<8x128xf32> -> vector<8x128xf32>
    %236 = arith.addf %229, %235 : vector<8x128xf32>
    %c1_200 = arith.constant 1 : index
    %237 = arith.index_cast %201 : i32 to index
    %c2_201 = arith.constant 2 : index
    %c0_202 = arith.constant 0 : index
    %238 = vector.load %arg2[%c1_200, %237, %c2_201, %c0_202] : memref<4x11x11x4xbf16, #tpu.memory_space<vmem>>, vector<1x1x8x4xbf16>
    %239 = vector.shape_cast %238 : vector<1x1x8x4xbf16> to vector<8x4xbf16>
    %c33 = arith.constant 33 : index
    %c0_203 = arith.constant 0 : index
    %c0_204 = arith.constant 0 : index
    %240 = vector.load %arg3[%c33, %c0_203, %c0_204] : memref<49x4x128xbf16, #tpu.memory_space<vmem>>, vector<1x4x128xbf16>
    %241 = vector.shape_cast %240 : vector<1x4x128xbf16> to vector<4x128xbf16>
    %cst_205 = arith.constant dense<0.000000e+00> : vector<8x128xf32>
    %242 = tpu.matmul %239, %241, %cst_205 {dimension_numbers = #tpu.dot_dimension_numbers<[1], [0], [0], [1], [0, 0, 1, 1], [], []>} : vector<8x4xbf16>, vector<4x128xbf16>, vector<8x128xf32> -> vector<8x128xf32>
    %243 = arith.addf %236, %242 : vector<8x128xf32>
    %c0_206 = arith.constant 0 : index
    %244 = arith.index_cast %201 : i32 to index
    %c3_207 = arith.constant 3 : index
    %c0_208 = arith.constant 0 : index
    %245 = vector.load %arg2[%c0_206, %244, %c3_207, %c0_208] : memref<4x11x11x4xbf16, #tpu.memory_space<vmem>>, vector<1x1x8x4xbf16>
    %246 = vector.shape_cast %245 : vector<1x1x8x4xbf16> to vector<8x4xbf16>
    %c34 = arith.constant 34 : index
    %c0_209 = arith.constant 0 : index
    %c0_210 = arith.constant 0 : index
    %247 = vector.load %arg3[%c34, %c0_209, %c0_210] : memref<49x4x128xbf16, #tpu.memory_space<vmem>>, vector<1x4x128xbf16>
    %248 = vector.shape_cast %247 : vector<1x4x128xbf16> to vector<4x128xbf16>
    %cst_211 = arith.constant dense<0.000000e+00> : vector<8x128xf32>
    %249 = tpu.matmul %246, %248, %cst_211 {dimension_numbers = #tpu.dot_dimension_numbers<[1], [0], [0], [1], [0, 0, 1, 1], [], []>} : vector<8x4xbf16>, vector<4x128xbf16>, vector<8x128xf32> -> vector<8x128xf32>
    %250 = arith.addf %243, %249 : vector<8x128xf32>
    %c2_i32_212 = arith.constant 2 : i32
    %251 = arith.addi %arg1, %c2_i32_212 : i32
    %c2_213 = arith.constant 2 : index
    %252 = arith.index_cast %251 : i32 to index
    %c0_214 = arith.constant 0 : index
    %c0_215 = arith.constant 0 : index
    %253 = vector.load %arg2[%c2_213, %252, %c0_214, %c0_215] : memref<4x11x11x4xbf16, #tpu.memory_space<vmem>>, vector<1x1x8x4xbf16>
    %254 = vector.shape_cast %253 : vector<1x1x8x4xbf16> to vector<8x4xbf16>
    %c35 = arith.constant 35 : index
    %c0_216 = arith.constant 0 : index
    %c0_217 = arith.constant 0 : index
    %255 = vector.load %arg3[%c35, %c0_216, %c0_217] : memref<49x4x128xbf16, #tpu.memory_space<vmem>>, vector<1x4x128xbf16>
    %256 = vector.shape_cast %255 : vector<1x4x128xbf16> to vector<4x128xbf16>
    %cst_218 = arith.constant dense<0.000000e+00> : vector<8x128xf32>
    %257 = tpu.matmul %254, %256, %cst_218 {dimension_numbers = #tpu.dot_dimension_numbers<[1], [0], [0], [1], [0, 0, 1, 1], [], []>} : vector<8x4xbf16>, vector<4x128xbf16>, vector<8x128xf32> -> vector<8x128xf32>
    %258 = arith.addf %250, %257 : vector<8x128xf32>
    %c3_219 = arith.constant 3 : index
    %259 = arith.index_cast %251 : i32 to index
    %c0_220 = arith.constant 0 : index
    %c0_221 = arith.constant 0 : index
    %260 = vector.load %arg2[%c3_219, %259, %c0_220, %c0_221] : memref<4x11x11x4xbf16, #tpu.memory_space<vmem>>, vector<1x1x8x4xbf16>
    %261 = vector.shape_cast %260 : vector<1x1x8x4xbf16> to vector<8x4xbf16>
    %c36 = arith.constant 36 : index
    %c0_222 = arith.constant 0 : index
    %c0_223 = arith.constant 0 : index
    %262 = vector.load %arg3[%c36, %c0_222, %c0_223] : memref<49x4x128xbf16, #tpu.memory_space<vmem>>, vector<1x4x128xbf16>
    %263 = vector.shape_cast %262 : vector<1x4x128xbf16> to vector<4x128xbf16>
    %cst_224 = arith.constant dense<0.000000e+00> : vector<8x128xf32>
    %264 = tpu.matmul %261, %263, %cst_224 {dimension_numbers = #tpu.dot_dimension_numbers<[1], [0], [0], [1], [0, 0, 1, 1], [], []>} : vector<8x4xbf16>, vector<4x128xbf16>, vector<8x128xf32> -> vector<8x128xf32>
    %265 = arith.addf %258, %264 : vector<8x128xf32>
    %c2_225 = arith.constant 2 : index
    %266 = arith.index_cast %251 : i32 to index
    %c1_226 = arith.constant 1 : index
    %c0_227 = arith.constant 0 : index
    %267 = vector.load %arg2[%c2_225, %266, %c1_226, %c0_227] : memref<4x11x11x4xbf16, #tpu.memory_space<vmem>>, vector<1x1x8x4xbf16>
    %268 = vector.shape_cast %267 : vector<1x1x8x4xbf16> to vector<8x4xbf16>
    %c37 = arith.constant 37 : index
    %c0_228 = arith.constant 0 : index
    %c0_229 = arith.constant 0 : index
    %269 = vector.load %arg3[%c37, %c0_228, %c0_229] : memref<49x4x128xbf16, #tpu.memory_space<vmem>>, vector<1x4x128xbf16>
    %270 = vector.shape_cast %269 : vector<1x4x128xbf16> to vector<4x128xbf16>
    %cst_230 = arith.constant dense<0.000000e+00> : vector<8x128xf32>
    %271 = tpu.matmul %268, %270, %cst_230 {dimension_numbers = #tpu.dot_dimension_numbers<[1], [0], [0], [1], [0, 0, 1, 1], [], []>} : vector<8x4xbf16>, vector<4x128xbf16>, vector<8x128xf32> -> vector<8x128xf32>
    %272 = arith.addf %265, %271 : vector<8x128xf32>
    %c3_231 = arith.constant 3 : index
    %273 = arith.index_cast %251 : i32 to index
    %c1_232 = arith.constant 1 : index
    %c0_233 = arith.constant 0 : index
    %274 = vector.load %arg2[%c3_231, %273, %c1_232, %c0_233] : memref<4x11x11x4xbf16, #tpu.memory_space<vmem>>, vector<1x1x8x4xbf16>
    %275 = vector.shape_cast %274 : vector<1x1x8x4xbf16> to vector<8x4xbf16>
    %c38 = arith.constant 38 : index
    %c0_234 = arith.constant 0 : index
    %c0_235 = arith.constant 0 : index
    %276 = vector.load %arg3[%c38, %c0_234, %c0_235] : memref<49x4x128xbf16, #tpu.memory_space<vmem>>, vector<1x4x128xbf16>
    %277 = vector.shape_cast %276 : vector<1x4x128xbf16> to vector<4x128xbf16>
    %cst_236 = arith.constant dense<0.000000e+00> : vector<8x128xf32>
    %278 = tpu.matmul %275, %277, %cst_236 {dimension_numbers = #tpu.dot_dimension_numbers<[1], [0], [0], [1], [0, 0, 1, 1], [], []>} : vector<8x4xbf16>, vector<4x128xbf16>, vector<8x128xf32> -> vector<8x128xf32>
    %279 = arith.addf %272, %278 : vector<8x128xf32>
    %c2_237 = arith.constant 2 : index
    %280 = arith.index_cast %251 : i32 to index
    %c2_238 = arith.constant 2 : index
    %c0_239 = arith.constant 0 : index
    %281 = vector.load %arg2[%c2_237, %280, %c2_238, %c0_239] : memref<4x11x11x4xbf16, #tpu.memory_space<vmem>>, vector<1x1x8x4xbf16>
    %282 = vector.shape_cast %281 : vector<1x1x8x4xbf16> to vector<8x4xbf16>
    %c39 = arith.constant 39 : index
    %c0_240 = arith.constant 0 : index
    %c0_241 = arith.constant 0 : index
    %283 = vector.load %arg3[%c39, %c0_240, %c0_241] : memref<49x4x128xbf16, #tpu.memory_space<vmem>>, vector<1x4x128xbf16>
    %284 = vector.shape_cast %283 : vector<1x4x128xbf16> to vector<4x128xbf16>
    %cst_242 = arith.constant dense<0.000000e+00> : vector<8x128xf32>
    %285 = tpu.matmul %282, %284, %cst_242 {dimension_numbers = #tpu.dot_dimension_numbers<[1], [0], [0], [1], [0, 0, 1, 1], [], []>} : vector<8x4xbf16>, vector<4x128xbf16>, vector<8x128xf32> -> vector<8x128xf32>
    %286 = arith.addf %279, %285 : vector<8x128xf32>
    %c3_243 = arith.constant 3 : index
    %287 = arith.index_cast %251 : i32 to index
    %c2_244 = arith.constant 2 : index
    %c0_245 = arith.constant 0 : index
    %288 = vector.load %arg2[%c3_243, %287, %c2_244, %c0_245] : memref<4x11x11x4xbf16, #tpu.memory_space<vmem>>, vector<1x1x8x4xbf16>
    %289 = vector.shape_cast %288 : vector<1x1x8x4xbf16> to vector<8x4xbf16>
    %c40 = arith.constant 40 : index
    %c0_246 = arith.constant 0 : index
    %c0_247 = arith.constant 0 : index
    %290 = vector.load %arg3[%c40, %c0_246, %c0_247] : memref<49x4x128xbf16, #tpu.memory_space<vmem>>, vector<1x4x128xbf16>
    %291 = vector.shape_cast %290 : vector<1x4x128xbf16> to vector<4x128xbf16>
    %cst_248 = arith.constant dense<0.000000e+00> : vector<8x128xf32>
    %292 = tpu.matmul %289, %291, %cst_248 {dimension_numbers = #tpu.dot_dimension_numbers<[1], [0], [0], [1], [0, 0, 1, 1], [], []>} : vector<8x4xbf16>, vector<4x128xbf16>, vector<8x128xf32> -> vector<8x128xf32>
    %293 = arith.addf %286, %292 : vector<8x128xf32>
    %c2_249 = arith.constant 2 : index
    %294 = arith.index_cast %251 : i32 to index
    %c3_250 = arith.constant 3 : index
    %c0_251 = arith.constant 0 : index
    %295 = vector.load %arg2[%c2_249, %294, %c3_250, %c0_251] : memref<4x11x11x4xbf16, #tpu.memory_space<vmem>>, vector<1x1x8x4xbf16>
    %296 = vector.shape_cast %295 : vector<1x1x8x4xbf16> to vector<8x4xbf16>
    %c41 = arith.constant 41 : index
    %c0_252 = arith.constant 0 : index
    %c0_253 = arith.constant 0 : index
    %297 = vector.load %arg3[%c41, %c0_252, %c0_253] : memref<49x4x128xbf16, #tpu.memory_space<vmem>>, vector<1x4x128xbf16>
    %298 = vector.shape_cast %297 : vector<1x4x128xbf16> to vector<4x128xbf16>
    %cst_254 = arith.constant dense<0.000000e+00> : vector<8x128xf32>
    %299 = tpu.matmul %296, %298, %cst_254 {dimension_numbers = #tpu.dot_dimension_numbers<[1], [0], [0], [1], [0, 0, 1, 1], [], []>} : vector<8x4xbf16>, vector<4x128xbf16>, vector<8x128xf32> -> vector<8x128xf32>
    %300 = arith.addf %293, %299 : vector<8x128xf32>
    %c3_i32 = arith.constant 3 : i32
    %301 = arith.addi %arg1, %c3_i32 : i32
    %c0_255 = arith.constant 0 : index
    %302 = arith.index_cast %301 : i32 to index
    %c0_256 = arith.constant 0 : index
    %c0_257 = arith.constant 0 : index
    %303 = vector.load %arg2[%c0_255, %302, %c0_256, %c0_257] : memref<4x11x11x4xbf16, #tpu.memory_space<vmem>>, vector<1x1x8x4xbf16>
    %304 = vector.shape_cast %303 : vector<1x1x8x4xbf16> to vector<8x4xbf16>
    %c42 = arith.constant 42 : index
    %c0_258 = arith.constant 0 : index
    %c0_259 = arith.constant 0 : index
    %305 = vector.load %arg3[%c42, %c0_258, %c0_259] : memref<49x4x128xbf16, #tpu.memory_space<vmem>>, vector<1x4x128xbf16>
    %306 = vector.shape_cast %305 : vector<1x4x128xbf16> to vector<4x128xbf16>
    %cst_260 = arith.constant dense<0.000000e+00> : vector<8x128xf32>
    %307 = tpu.matmul %304, %306, %cst_260 {dimension_numbers = #tpu.dot_dimension_numbers<[1], [0], [0], [1], [0, 0, 1, 1], [], []>} : vector<8x4xbf16>, vector<4x128xbf16>, vector<8x128xf32> -> vector<8x128xf32>
    %308 = arith.addf %300, %307 : vector<8x128xf32>
    %c1_261 = arith.constant 1 : index
    %309 = arith.index_cast %301 : i32 to index
    %c0_262 = arith.constant 0 : index
    %c0_263 = arith.constant 0 : index
    %310 = vector.load %arg2[%c1_261, %309, %c0_262, %c0_263] : memref<4x11x11x4xbf16, #tpu.memory_space<vmem>>, vector<1x1x8x4xbf16>
    %311 = vector.shape_cast %310 : vector<1x1x8x4xbf16> to vector<8x4xbf16>
    %c43 = arith.constant 43 : index
    %c0_264 = arith.constant 0 : index
    %c0_265 = arith.constant 0 : index
    %312 = vector.load %arg3[%c43, %c0_264, %c0_265] : memref<49x4x128xbf16, #tpu.memory_space<vmem>>, vector<1x4x128xbf16>
    %313 = vector.shape_cast %312 : vector<1x4x128xbf16> to vector<4x128xbf16>
    %cst_266 = arith.constant dense<0.000000e+00> : vector<8x128xf32>
    %314 = tpu.matmul %311, %313, %cst_266 {dimension_numbers = #tpu.dot_dimension_numbers<[1], [0], [0], [1], [0, 0, 1, 1], [], []>} : vector<8x4xbf16>, vector<4x128xbf16>, vector<8x128xf32> -> vector<8x128xf32>
    %315 = arith.addf %308, %314 : vector<8x128xf32>
    %c0_267 = arith.constant 0 : index
    %316 = arith.index_cast %301 : i32 to index
    %c1_268 = arith.constant 1 : index
    %c0_269 = arith.constant 0 : index
    %317 = vector.load %arg2[%c0_267, %316, %c1_268, %c0_269] : memref<4x11x11x4xbf16, #tpu.memory_space<vmem>>, vector<1x1x8x4xbf16>
    %318 = vector.shape_cast %317 : vector<1x1x8x4xbf16> to vector<8x4xbf16>
    %c44 = arith.constant 44 : index
    %c0_270 = arith.constant 0 : index
    %c0_271 = arith.constant 0 : index
    %319 = vector.load %arg3[%c44, %c0_270, %c0_271] : memref<49x4x128xbf16, #tpu.memory_space<vmem>>, vector<1x4x128xbf16>
    %320 = vector.shape_cast %319 : vector<1x4x128xbf16> to vector<4x128xbf16>
    %cst_272 = arith.constant dense<0.000000e+00> : vector<8x128xf32>
    %321 = tpu.matmul %318, %320, %cst_272 {dimension_numbers = #tpu.dot_dimension_numbers<[1], [0], [0], [1], [0, 0, 1, 1], [], []>} : vector<8x4xbf16>, vector<4x128xbf16>, vector<8x128xf32> -> vector<8x128xf32>
    %322 = arith.addf %315, %321 : vector<8x128xf32>
    %c1_273 = arith.constant 1 : index
    %323 = arith.index_cast %301 : i32 to index
    %c1_274 = arith.constant 1 : index
    %c0_275 = arith.constant 0 : index
    %324 = vector.load %arg2[%c1_273, %323, %c1_274, %c0_275] : memref<4x11x11x4xbf16, #tpu.memory_space<vmem>>, vector<1x1x8x4xbf16>
    %325 = vector.shape_cast %324 : vector<1x1x8x4xbf16> to vector<8x4xbf16>
    %c45 = arith.constant 45 : index
    %c0_276 = arith.constant 0 : index
    %c0_277 = arith.constant 0 : index
    %326 = vector.load %arg3[%c45, %c0_276, %c0_277] : memref<49x4x128xbf16, #tpu.memory_space<vmem>>, vector<1x4x128xbf16>
    %327 = vector.shape_cast %326 : vector<1x4x128xbf16> to vector<4x128xbf16>
    %cst_278 = arith.constant dense<0.000000e+00> : vector<8x128xf32>
    %328 = tpu.matmul %325, %327, %cst_278 {dimension_numbers = #tpu.dot_dimension_numbers<[1], [0], [0], [1], [0, 0, 1, 1], [], []>} : vector<8x4xbf16>, vector<4x128xbf16>, vector<8x128xf32> -> vector<8x128xf32>
    %329 = arith.addf %322, %328 : vector<8x128xf32>
    %c0_279 = arith.constant 0 : index
    %330 = arith.index_cast %301 : i32 to index
    %c2_280 = arith.constant 2 : index
    %c0_281 = arith.constant 0 : index
    %331 = vector.load %arg2[%c0_279, %330, %c2_280, %c0_281] : memref<4x11x11x4xbf16, #tpu.memory_space<vmem>>, vector<1x1x8x4xbf16>
    %332 = vector.shape_cast %331 : vector<1x1x8x4xbf16> to vector<8x4xbf16>
    %c46 = arith.constant 46 : index
    %c0_282 = arith.constant 0 : index
    %c0_283 = arith.constant 0 : index
    %333 = vector.load %arg3[%c46, %c0_282, %c0_283] : memref<49x4x128xbf16, #tpu.memory_space<vmem>>, vector<1x4x128xbf16>
    %334 = vector.shape_cast %333 : vector<1x4x128xbf16> to vector<4x128xbf16>
    %cst_284 = arith.constant dense<0.000000e+00> : vector<8x128xf32>
    %335 = tpu.matmul %332, %334, %cst_284 {dimension_numbers = #tpu.dot_dimension_numbers<[1], [0], [0], [1], [0, 0, 1, 1], [], []>} : vector<8x4xbf16>, vector<4x128xbf16>, vector<8x128xf32> -> vector<8x128xf32>
    %336 = arith.addf %329, %335 : vector<8x128xf32>
    %c1_285 = arith.constant 1 : index
    %337 = arith.index_cast %301 : i32 to index
    %c2_286 = arith.constant 2 : index
    %c0_287 = arith.constant 0 : index
    %338 = vector.load %arg2[%c1_285, %337, %c2_286, %c0_287] : memref<4x11x11x4xbf16, #tpu.memory_space<vmem>>, vector<1x1x8x4xbf16>
    %339 = vector.shape_cast %338 : vector<1x1x8x4xbf16> to vector<8x4xbf16>
    %c47 = arith.constant 47 : index
    %c0_288 = arith.constant 0 : index
    %c0_289 = arith.constant 0 : index
    %340 = vector.load %arg3[%c47, %c0_288, %c0_289] : memref<49x4x128xbf16, #tpu.memory_space<vmem>>, vector<1x4x128xbf16>
    %341 = vector.shape_cast %340 : vector<1x4x128xbf16> to vector<4x128xbf16>
    %cst_290 = arith.constant dense<0.000000e+00> : vector<8x128xf32>
    %342 = tpu.matmul %339, %341, %cst_290 {dimension_numbers = #tpu.dot_dimension_numbers<[1], [0], [0], [1], [0, 0, 1, 1], [], []>} : vector<8x4xbf16>, vector<4x128xbf16>, vector<8x128xf32> -> vector<8x128xf32>
    %343 = arith.addf %336, %342 : vector<8x128xf32>
    %c0_291 = arith.constant 0 : index
    %344 = arith.index_cast %301 : i32 to index
    %c3_292 = arith.constant 3 : index
    %c0_293 = arith.constant 0 : index
    %345 = vector.load %arg2[%c0_291, %344, %c3_292, %c0_293] : memref<4x11x11x4xbf16, #tpu.memory_space<vmem>>, vector<1x1x8x4xbf16>
    %346 = vector.shape_cast %345 : vector<1x1x8x4xbf16> to vector<8x4xbf16>
    %c48 = arith.constant 48 : index
    %c0_294 = arith.constant 0 : index
    %c0_295 = arith.constant 0 : index
    %347 = vector.load %arg3[%c48, %c0_294, %c0_295] : memref<49x4x128xbf16, #tpu.memory_space<vmem>>, vector<1x4x128xbf16>
    %348 = vector.shape_cast %347 : vector<1x4x128xbf16> to vector<4x128xbf16>
    %cst_296 = arith.constant dense<0.000000e+00> : vector<8x128xf32>
    %349 = tpu.matmul %346, %348, %cst_296 {dimension_numbers = #tpu.dot_dimension_numbers<[1], [0], [0], [1], [0, 0, 1, 1], [], []>} : vector<8x4xbf16>, vector<4x128xbf16>, vector<8x128xf32> -> vector<8x128xf32>
    %350 = arith.addf %343, %349 : vector<8x128xf32>
    %c0_297 = arith.constant 0 : index
    %c0_298 = arith.constant 0 : index
    %351 = vector.load %arg4[%c0_297, %c0_298] : memref<1x128xf32, #tpu.memory_space<vmem>>, vector<1x128xf32>
    %352 = vector.broadcast %351 : vector<1x128xf32> to vector<8x128xf32>
    %353 = arith.addf %350, %352 : vector<8x128xf32>
    %cst_299 = arith.constant 0.000000e+00 : f32
    %354 = vector.broadcast %cst_299 : f32 to vector<8x128xf32>
    %355 = arith.cmpf ogt, %353, %354 : vector<8x128xf32>
    %356 = math.exp %353 : vector<8x128xf32>
    %cst_300 = arith.constant 1.000000e+00 : f32
    %357 = vector.broadcast %cst_300 : f32 to vector<8x128xf32>
    %358 = arith.subf %356, %357 : vector<8x128xf32>
    %359 = arith.select %355, %353, %358 : vector<8x128xi1>, vector<8x128xf32>
    %c0_301 = arith.constant 0 : index
    %c0_302 = arith.constant 0 : index
    %360 = vector.load %arg5[%c0_301, %c0_302] : memref<1x128xf32, #tpu.memory_space<vmem>>, vector<1x128xf32>
    %361 = vector.broadcast %360 : vector<1x128xf32> to vector<8x128xf32>
    %362 = arith.mulf %359, %361 : vector<8x128xf32>
    %c0_303 = arith.constant 0 : index
    %c0_304 = arith.constant 0 : index
    %363 = vector.load %arg6[%c0_303, %c0_304] : memref<1x128xf32, #tpu.memory_space<vmem>>, vector<1x128xf32>
    %364 = vector.broadcast %363 : vector<1x128xf32> to vector<8x128xf32>
    %365 = arith.addf %362, %364 : vector<8x128xf32>
    %c0_305 = arith.constant 0 : index
    %c0_306 = arith.constant 0 : index
    %c0_307 = arith.constant 0 : index
    %c0_308 = arith.constant 0 : index
    %366 = vector.load %arg7[%c0_305, %c0_306, %c0_307, %c0_308] : memref<1x1x8x128xf32, #tpu.memory_space<vmem>>, vector<1x1x8x128xf32>
    %367 = vector.shape_cast %366 : vector<1x1x8x128xf32> to vector<8x128xf32>
    %368 = vector.shape_cast %365 : vector<8x128xf32> to vector<1x1x8x128xf32>
    tpu.vector_store %arg7[%c0_305, %c0_306, %c0_307, %c0_308], %368 {strides = array<i32>} : memref<1x1x8x128xf32, #tpu.memory_space<vmem>>, vector<1x1x8x128xf32>,
    return
  }
  func.func @transform_0(%arg0: i32, %arg1: i32) -> (i32, i32, i32, i32) {
    %c0_i32 = arith.constant 0 : i32
    %c0_i32_0 = arith.constant 0 : i32
    %c0_i32_1 = arith.constant 0 : i32
    %c0_i32_2 = arith.constant 0 : i32
    return %arg0, %c0_i32, %c0_i32_0, %c0_i32_1 : i32, i32, i32, i32
  }
  func.func @transform_1(%arg0: i32, %arg1: i32) -> (i32, i32, i32) {
    %c0_i32 = arith.constant 0 : i32
    %c0_i32_0 = arith.constant 0 : i32
    %c0_i32_1 = arith.constant 0 : i32
    %c0_i32_2 = arith.constant 0 : i32
    return %c0_i32, %c0_i32_0, %c0_i32_1 : i32, i32, i32
  }
  func.func @transform_2(%arg0: i32, %arg1: i32) -> (i32, i32) {
    %c0_i32 = arith.constant 0 : i32
    %c0_i32_0 = arith.constant 0 : i32
    %c0_i32_1 = arith.constant 0 : i32
    return %c0_i32, %c0_i32_0 : i32, i32
  }
  func.func @transform_3(%arg0: i32, %arg1: i32) -> (i32, i32) {
    %c0_i32 = arith.constant 0 : i32
    %c0_i32_0 = arith.constant 0 : i32
    %c0_i32_1 = arith.constant 0 : i32
    return %c0_i32, %c0_i32_0 : i32, i32
  }
  func.func @transform_4(%arg0: i32, %arg1: i32) -> (i32, i32) {
    %c0_i32 = arith.constant 0 : i32
    %c0_i32_0 = arith.constant 0 : i32
    %c0_i32_1 = arith.constant 0 : i32
    return %c0_i32, %c0_i32_0 : i32, i32
  }
  func.func @transform_5(%arg0: i32, %arg1: i32) -> (i32, i32, i32, i32) {
    %c0_i32 = arith.constant 0 : i32
    %c0_i32_0 = arith.constant 0 : i32
    %c0_i32_1 = arith.constant 0 : i32
    return %arg0, %arg1, %c0_i32, %c0_i32_0 : i32, i32, i32, i32
  }
}

</mosaic_0001>

<llo_original>
// kernel: conv_block_forward.1
$region0: #{conv_block_forward.1}
  #allocation0 [shape = 'u32[]', space=smem, size = 0x4, offset = 0x4, fixed_abs, tag = 'smem constant byte address 0x4 - core index']
  #allocation1 [shape = 'u32[72,128]{1,0:T(1,128)}', space=vmem, size = 0x9000, scoped, tag = 'internal scratch']
  %s0 = inlined_call_operand.vmem [shape: bf16[8,11,11,4], index: 0, kind: input, shape index: {}]
  %s1 = inlined_call_operand.vmem [shape: bf16[49,4,128], index: 1, kind: input, shape index: {}]
  %s2 = inlined_call_operand.vmem [shape: f32[1,128], index: 2, kind: input, shape index: {}]
  %s3 = inlined_call_operand.vmem [shape: f32[1,128], index: 3, kind: input, shape index: {}]
  %s4 = inlined_call_operand.vmem [shape: f32[1,128], index: 4, kind: input, shape index: {}]
  %s5 = inlined_call_operand.vmem [shape: f32[2,8,8,128], index: 5, kind: output, shape index: {}]
  %s6 = sld [smem:[#allocation0]]
  $region53: #{conv_block_forward.1} parent=0
    _
  %s8 = ssub.s32 1, %s6
  %s9 = scalar_select 0, %s8, %s6
  loop: start=0, step=1, limit=18
  $region2: #{conv_block_forward.1} parent=0 // loop_pre_header
    _
  $region3: #{conv_block_forward.1} parent=0 // loop_header
    %s11 = sphi 0, %s15
    %p12 = scmp.ge.s32.totalorder %s11, 18
    %s18 = sphi 0, %s30
    %s19 = sphi 0, %s26
    %s20 = sphi 0, %s18
    %s21 = sphi 0, %s19
    %s22 = sphi 0, %s20
    %s23 = sphi 0, %s21
    %s33 = sphi 0, %s35
    %s36 = sphi 0, %s33
    %s37 = sphi 0, %s36
    %s53 = sphi 0, %s37
    %s57 = sphi 0, %s57
    %s59 = sphi 0, %s57
    %s60 = sphi 0, %s59
    %s74 = sphi 0, %s60
    %s78 = sphi 0, %s78
    %s80 = sphi 0, %s78
    %s81 = sphi 0, %s80
    %s95 = sphi 0, %s81
    %s99 = sphi 0, %s99
    %s101 = sphi 0, %s99
    %s102 = sphi 0, %s101
    %s116 = sphi 0, %s102
    %s120 = sphi 0, %s120
    %s122 = sphi 0, %s120
    %s123 = sphi 0, %s122
    %s137 = sphi 0, %s123
    %s145 = sphi 0, %s147
    %s148 = sphi 0, %s145
    %s149 = sphi 0, %s148
    %s165 = sphi 0, %s149
  $region4: #{conv_block_forward.1} parent=0 // loop_header_branch
    %14 = sbr.rel (%p12) target = $region8
  $region5: #{conv_block_forward.1} parent=0 // loop_body
    %s16 = ssub.s32 %s11, 1
    %s17 = ssub.s32 %s11, 2
    %s24 = sadd.s32 1, %s19
    %p25 = scmp.ge.s32.totalorder %s24, 8
    %s26 = scalar_select %p25, 0, %s24
    %s27 = sadd.s32 1, %s18
    %s28 = scalar_select %p25, %s27, %s18
    %p29 = scmp.ge.s32.totalorder %s28, 2
    %s30 = scalar_select %p29, 0, %s28
    %s31 = ssub.s32 %s18, %s30
    %p32 = scmp.eq.s32.totalorder %s31, 0
    %s34 = sadd.s32 %s33, 1
    %s35 = scalar_select %p32, %s33, %s34
    %p38 = pneg %p32
    %p39 = scmp.eq.s32.totalorder %s11, 15
    %p40 = por %p38, %p39
    %p41 = scmp.ne.s32.totalorder %s33, %s36
    %p42 = scmp.eq.s32.totalorder %s11, 0
    %p43 = por %p41, %p42
    %p44 = scmp.ne.s32.totalorder %s33, %s36
    %p45 = scmp.eq.s32.totalorder %s16, 15
    %p46 = por %p44, %p45
    %p47 = scmp.ne.s32.totalorder %s36, %s37
    %p48 = scmp.eq.s32.totalorder %s16, 0
    %p49 = por %p47, %p48
    %p50 = scmp.ne.s32.totalorder %s36, %s37
    %p51 = scmp.eq.s32.totalorder %s17, 15
    %p52 = por %p50, %p51
    %p54 = scmp.ne.s32.totalorder %s37, %s53
    %p55 = scmp.eq.s32.totalorder %s17, 0
    %p56 = por %p54, %p55
    %s58 = sadd.s32 %s57, 1
    %p61 = scmp.eq.s32.totalorder %s11, 15
    %p62 = scmp.ne.s32.totalorder %s57, %s59
    %p63 = scmp.eq.s32.totalorder %s11, 0
    %p64 = por %p62, %p63
    %p65 = scmp.ne.s32.totalorder %s57, %s59
    %p66 = scmp.eq.s32.totalorder %s16, 15
    %p67 = por %p65, %p66
    %p68 = scmp.ne.s32.totalorder %s59, %s60
    %p69 = scmp.eq.s32.totalorder %s16, 0
    %p70 = por %p68, %p69
    %p71 = scmp.ne.s32.totalorder %s59, %s60
    %p72 = scmp.eq.s32.totalorder %s17, 15
    %p73 = por %p71, %p72
    %p75 = scmp.ne.s32.totalorder %s60, %s74
    %p76 = scmp.eq.s32.totalorder %s17, 0
    %p77 = por %p75, %p76
    %s79 = sadd.s32 %s78, 1
    %p82 = scmp.eq.s32.totalorder %s11, 15
    %p83 = scmp.ne.s32.totalorder %s78, %s80
    %p84 = scmp.eq.s32.totalorder %s11, 0
    %p85 = por %p83, %p84
    %p86 = scmp.ne.s32.totalorder %s78, %s80
    %p87 = scmp.eq.s32.totalorder %s16, 15
    %p88 = por %p86, %p87
    %p89 = scmp.ne.s32.totalorder %s80, %s81
    %p90 = scmp.eq.s32.totalorder %s16, 0
    %p91 = por %p89, %p90
    %p92 = scmp.ne.s32.totalorder %s80, %s81
    %p93 = scmp.eq.s32.totalorder %s17, 15
    %p94 = por %p92, %p93
    %p96 = scmp.ne.s32.totalorder %s81, %s95
    %p97 = scmp.eq.s32.totalorder %s17, 0
    %p98 = por %p96, %p97
    %s100 = sadd.s32 %s99, 1
    %p103 = scmp.eq.s32.totalorder %s11, 15
    %p104 = scmp.ne.s32.totalorder %s99, %s101
    %p105 = scmp.eq.s32.totalorder %s11, 0
    %p106 = por %p104, %p105
    %p107 = scmp.ne.s32.totalorder %s99, %s101
    %p108 = scmp.eq.s32.totalorder %s16, 15
    %p109 = por %p107, %p108
    %p110 = scmp.ne.s32.totalorder %s101, %s102
    %p111 = scmp.eq.s32.totalorder %s16, 0
    %p112 = por %p110, %p111
    %p113 = scmp.ne.s32.totalorder %s101, %s102
    %p114 = scmp.eq.s32.totalorder %s17, 15
    %p115 = por %p113, %p114
    %p117 = scmp.ne.s32.totalorder %s102, %s116
    %p118 = scmp.eq.s32.totalorder %s17, 0
    %p119 = por %p117, %p118
    %s121 = sadd.s32 %s120, 1
    %p124 = scmp.eq.s32.totalorder %s11, 15
    %p125 = scmp.ne.s32.totalorder %s120, %s122
    %p126 = scmp.eq.s32.totalorder %s11, 0
    %p127 = por %p125, %p126
    %p128 = scmp.ne.s32.totalorder %s120, %s122
    %p129 = scmp.eq.s32.totalorder %s16, 15
    %p130 = por %p128, %p129
    %p131 = scmp.ne.s32.totalorder %s122, %s123
    %p132 = scmp.eq.s32.totalorder %s16, 0
    %p133 = por %p131, %p132
    %p134 = scmp.ne.s32.totalorder %s122, %s123
    %p135 = scmp.eq.s32.totalorder %s17, 15
    %p136 = por %p134, %p135
    %p138 = scmp.ne.s32.totalorder %s123, %s137
    %p139 = scmp.eq.s32.totalorder %s17, 0
    %p140 = por %p138, %p139
    %s141 = ssub.s32 %s18, %s30
    %s142 = ssub.s32 %s19, %s26
    %s143 = sor.u32 %s141, %s142
    %p144 = scmp.eq.s32.totalorder %s143, 0
    %s146 = sadd.s32 %s145, 1
    %s147 = scalar_select %p144, %s145, %s146
    %p150 = pneg %p144
    %p151 = scmp.eq.s32.totalorder %s11, 15
    %p152 = por %p150, %p151
    %p153 = scmp.ne.s32.totalorder %s145, %s148
    %p154 = scmp.eq.s32.totalorder %s11, 0
    %p155 = por %p153, %p154
    %p156 = scmp.ne.s32.totalorder %s145, %s148
    %p157 = scmp.eq.s32.totalorder %s16, 15
    %p158 = por %p156, %p157
    %p159 = scmp.ne.s32.totalorder %s148, %s149
    %p160 = scmp.eq.s32.totalorder %s16, 0
    %p161 = por %p159, %p160
    %p162 = scmp.ne.s32.totalorder %s148, %s149
    %p163 = scmp.eq.s32.totalorder %s17, 15
    %p164 = por %p162, %p163
    %p166 = scmp.ne.s32.totalorder %s149, %s165
    %p167 = scmp.eq.s32.totalorder %s17, 0
    %p168 = por %p166, %p167
    %p169 = scmp.le.s32.totalorder 1, %s11
    %p170 = scmp.lt.s32.totalorder %s11, 17
    %p171 = pnand %p169, %p170
    %p172 = pneg %p171
    // Predicated region
    $region9: #{conv_block_forward.1} parent=5 // pred_check
      _
    $region10: #{conv_block_forward.1} parent=5 // pred_check_branch
      %174 = sbr.rel (%p171) target = $region12
    $region11: #{conv_block_forward.1} parent=5 // pred_region
      %s175 = ssub.s32 %s11, 1
      // Predicated region
      $region13: #{conv_block_forward.1} parent=11 // pred_check
        %p176 = pneg %p70
      $region14: #{conv_block_forward.1} parent=11 // pred_check_branch
        %178 = sbr.rel (%p176) target = $region16
      $region15: #{conv_block_forward.1} parent=11 // pred_region
        _
      $region16: #{conv_block_forward.1} parent=11 // pred_fallthru
        _
      // Predicated region
      $region17: #{conv_block_forward.1} parent=11 // pred_check
        %p179 = pneg %p91
      $region18: #{conv_block_forward.1} parent=11 // pred_check_branch
        %181 = sbr.rel (%p179) target = $region20
      $region19: #{conv_block_forward.1} parent=11 // pred_region
        _
      $region20: #{conv_block_forward.1} parent=11 // pred_fallthru
        _
      // Predicated region
      $region21: #{conv_block_forward.1} parent=11 // pred_check
        %p182 = pneg %p112
      $region22: #{conv_block_forward.1} parent=11 // pred_check_branch
        %184 = sbr.rel (%p182) target = $region24
      $region23: #{conv_block_forward.1} parent=11 // pred_region
        _
      $region24: #{conv_block_forward.1} parent=11 // pred_fallthru
        _
      // Predicated region
      $region25: #{conv_block_forward.1} parent=11 // pred_check
        %p185 = pneg %p133
      $region26: #{conv_block_forward.1} parent=11 // pred_check_branch
        %187 = sbr.rel (%p185) target = $region28
      $region27: #{conv_block_forward.1} parent=11 // pred_region
        _
      $region28: #{conv_block_forward.1} parent=11 // pred_fallthru
        _
    $region12: #{conv_block_forward.1} parent=5 // pred_fallthru
      _
    %p188 = scmp.lt.s32.totalorder %s11, 16
    // Predicated region
    $region29: #{conv_block_forward.1} parent=5 // pred_check
      %p189 = pneg %p188
    $region30: #{conv_block_forward.1} parent=5 // pred_check_branch
      %191 = sbr.rel (%p189) target = $region32
    $region31: #{conv_block_forward.1} parent=5 // pred_region
      // Predicated region
      $region33: #{conv_block_forward.1} parent=31 // pred_check
        %p192 = pneg %p43
      $region34: #{conv_block_forward.1} parent=31 // pred_check_branch
        %194 = sbr.rel (%p192) target = $region36
      $region35: #{conv_block_forward.1} parent=31 // pred_region
        %s195 = smul.u32 4, %s18
        %p196 = scmp.lt.s32.totalorder %s195, 7
        %s197 = scalar_select %p196, %s195, 7
        %s198 = smul.addr %s197, 22
        %s199 = smul.addr %s198, 4
        %s200 = scalar_lea.vmem %s0, %s199
        %s201 = smul.u32 4, %s18
      $region36: #{conv_block_forward.1} parent=31 // pred_fallthru
        _
    $region32: #{conv_block_forward.1} parent=5 // pred_fallthru
      _
    %p202 = scmp.le.s32.totalorder 1, %s11
    %p203 = scmp.lt.s32.totalorder %s11, 17
    %p204 = pnand %p202, %p203
    %p205 = pneg %p204
    // Predicated region
    $region37: #{conv_block_forward.1} parent=5 // pred_check
      _
    $region38: #{conv_block_forward.1} parent=5 // pred_check_branch
      %207 = sbr.rel (%p204) target = $region40
    $region39: #{conv_block_forward.1} parent=5 // pred_region
      %s208 = ssub.s32 %s11, 1
      %s209 = smul.u32 4, %s20
      %p210 = scmp.lt.s32.totalorder %s209, 7
      %s211 = scalar_select %p210, %s209, 7
      %s212 = smul.addr %s211, 22
      %s213 = smul.addr %s212, 4
      %s214 = scalar_lea.vmem %s0, %s213
      %p215 = pneg %p49
      %p216 = pneg %p46
      %p217 = pneg %p70
      %p218 = pneg %p67
      %p219 = pneg %p91
      %p220 = pneg %p88
      %p221 = pneg %p112
      %p222 = pneg %p109
      %p223 = pneg %p133
      %p224 = pneg %p130
      %p225 = pneg %p161
      %p226 = pneg %p158
      %p227 = scmp.lt.s32.totalorder %s20, 1
      %s228 = scalar_select %p227, %s20, 1
      %p229 = scmp.lt.s32.totalorder %s21, 7
      %s230 = scalar_select %p229, %s21, 7
      %s231 = smul.addr %s228, 8
      %s232 = sadd.s32 %s230, %s231
      %s233 = smul.addr %s232, 8
      %s234 = scalar_lea.vmem %s5, %s233
      %s235 = smul.u32 4, %s20
      %p236 = scmp.lt.s32.totalorder %s235, 7
      %s237 = scalar_select %p236, %s235, 7
      %s238 = smul.addr %s237, 22
      %s239 = smul.addr %s238, 4
      %s240 = scalar_lea.vmem %s0, %s239
      %s241 = smul.u32 4, %s20
      %p242 = scmp.lt.s32.totalorder %s20, 1
      %s243 = scalar_select %p242, %s20, 1
      %p244 = scmp.lt.s32.totalorder %s21, 7
      %s245 = scalar_select %p244, %s21, 7
      %s246 = smul.addr %s243, 8
      %s247 = sadd.s32 %s245, %s246
      %s248 = smul.addr %s247, 8
      %s249 = scalar_lea.vmem %s5, %s248
      %s251 = smul.u32 %s21, 2
      %s252 = smul.addr %s251, 4
      %s253 = scalar_lea.vmem %s240, %s252
      %v254 = vld [vmem:[%s253] sm:$0xf]
      %v255 = vld [vmem:[%s1] sm:$0x3]
      %s256 = sadd.s32 %s251, 22
      %s257 = smul.addr %s256, 4
      %s258 = scalar_lea.vmem %s240, %s257
      %v259 = vld [vmem:[%s258] sm:$0xf]
      %s260 = scalar_lea.vmem %s1, 2
      %v261 = vld [vmem:[%s260] sm:$0x3]
      %vm262 = vcmask 31744
      %v264 = vsel %vm262, %v259, 0
      %vm266 = vcmask 1041408
      %v268 = vsel %vm266, %v261, 0
      %270 = vmatpush.bf16.msra.mxu0 0
      %271 = vmatpush.bf16.msra.mxu0 0
      %272 = vmatpush.bf16.msra.mxu0 0
      %273 = vmatpush.bf16.msra.mxu0 0
      %274 = vmatpush.bf16.msra.mxu0 0
      %275 = vmatpush.bf16.msra.mxu0 0
      %276 = vmatpush.bf16.msra.mxu0 0
      %277 = vmatpush.bf16.msra.mxu0 %v268
      %278 = vmatmul.bf16.gmra.mxu0 %v264
      %v279 = vpop.f32.mrf.mxu0
      %v280 = vadd.f32 0.0, %v279
      %v281 = vpop.f32.mrf.mxu0
      %282 = vdwg.mxu0
      %v284 = vsel %vm262, %v254, 0
      %v287 = vsel %vm266, %v255, 0
      %289 = vmatpush.bf16.msra.mxu0 0
      %290 = vmatpush.bf16.msra.mxu0 0
      %291 = vmatpush.bf16.msra.mxu0 0
      %292 = vmatpush.bf16.msra.mxu0 0
      %293 = vmatpush.bf16.msra.mxu0 0
      %294 = vmatpush.bf16.msra.mxu0 0
      %295 = vmatpush.bf16.msra.mxu0 0
      %296 = vmatpush.bf16.msra.mxu0 %v287
      %297 = vmatmul.bf16.gmra.mxu0 %v284
      %v298 = vpop.f32.mrf.mxu0
      %v299 = vadd.f32 %v280, %v298
      %v300 = vpop.f32.mrf.mxu0
      %301 = vdwg.mxu0
      %v302 = vld [vmem:[%s253] sm:$0xf]
      %v303 = vld [vmem:[%s253 + $0x4] sm:$0x1]
      %s304 = scalar_lea.vmem %s1, 4
      %v305 = vld [vmem:[%s304] sm:$0x3]
      %v308 = vunpack.c.l.b16 %v302
      %v309 = vunpack.c.l.b16 %v303
      %v310 = vpack.c.b16 %v309, %v308
      %v312 = vshrl.u32 %v310, 16
      %v314 = vshll.u32 %v310, 16
      %v316 = vrot.slane %v314, 1
      %v317 = vor.u32 %v312, %v316
      %v319 = vsel %vm262, %v317, 0
      %v322 = vsel %vm266, %v305, 0
      %324 = vmatpush.bf16.msra.mxu0 0
      %325 = vmatpush.bf16.msra.mxu0 0
      %326 = vmatpush.bf16.msra.mxu0 0
      %327 = vmatpush.bf16.msra.mxu0 0
      %328 = vmatpush.bf16.msra.mxu0 0
      %329 = vmatpush.bf16.msra.mxu0 0
      %330 = vmatpush.bf16.msra.mxu0 0
      %331 = vmatpush.bf16.msra.mxu0 %v322
      %332 = vmatmul.bf16.gmra.mxu0 %v319
      %v333 = vpop.f32.mrf.mxu0
      %v334 = vadd.f32 0.0, %v333
      %v335 = vpop.f32.mrf.mxu0
      %336 = vdwg.mxu0
      %v337 = vadd.f32 %v299, %v334
      %v338 = vld [vmem:[%s258] sm:$0xf]
      %v339 = vld [vmem:[%s258 + $0x4] sm:$0x1]
      %s340 = scalar_lea.vmem %s1, 6
      %v341 = vld [vmem:[%s340] sm:$0x3]
      %v344 = vunpack.c.l.b16 %v338
      %v345 = vunpack.c.l.b16 %v339
      %v346 = vpack.c.b16 %v345, %v344
      %v348 = vshrl.u32 %v346, 16
      %v350 = vshll.u32 %v346, 16
      %v352 = vrot.slane %v350, 1
      %v353 = vor.u32 %v348, %v352
      %v355 = vsel %vm262, %v353, 0
      %v358 = vsel %vm266, %v341, 0
      %360 = vmatpush.bf16.msra.mxu0 0
      %361 = vmatpush.bf16.msra.mxu0 0
      %362 = vmatpush.bf16.msra.mxu0 0
      %363 = vmatpush.bf16.msra.mxu0 0
      %364 = vmatpush.bf16.msra.mxu0 0
      %365 = vmatpush.bf16.msra.mxu0 0
      %366 = vmatpush.bf16.msra.mxu0 0
      %367 = vmatpush.bf16.msra.mxu0 %v358
      %368 = vmatmul.bf16.gmra.mxu0 %v355
      %v369 = vpop.f32.mrf.mxu0
      %v370 = vadd.f32 0.0, %v369
      %v371 = vpop.f32.mrf.mxu0
      %372 = vdwg.mxu0
      %v373 = vadd.f32 %v337, %v370
      %v374 = vld [vmem:[%s253] sm:$0xe]
      %s375 = scalar_lea.vmem %s1, 8
      %v376 = vld [vmem:[%s375] sm:$0x3]
      %v378 = vunpack.c.l.b16 %v374
      %v379 = vpack.c.b16 %v309, %v378
      %v380 = vrot.slane %v379, 1
      %v382 = vsel %vm262, %v380, 0
      %v385 = vsel %vm266, %v376, 0
      %387 = vmatpush.bf16.msra.mxu0 0
      %388 = vmatpush.bf16.msra.mxu0 0
      %389 = vmatpush.bf16.msra.mxu0 0
      %390 = vmatpush.bf16.msra.mxu0 0
      %391 = vmatpush.bf16.msra.mxu0 0
      %392 = vmatpush.bf16.msra.mxu0 0
      %393 = vmatpush.bf16.msra.mxu0 0
      %394 = vmatpush.bf16.msra.mxu0 %v385
      %395 = vmatmul.bf16.gmra.mxu0 %v382
      %v396 = vpop.f32.mrf.mxu0
      %v397 = vadd.f32 0.0, %v396
      %v398 = vpop.f32.mrf.mxu0
      %399 = vdwg.mxu0
      %v400 = vadd.f32 %v373, %v397
      %v401 = vld [vmem:[%s258] sm:$0xe]
      %s402 = scalar_lea.vmem %s1, 10
      %v403 = vld [vmem:[%s402] sm:$0x3]
      %v405 = vunpack.c.l.b16 %v401
      %v406 = vpack.c.b16 %v345, %v405
      %v407 = vrot.slane %v406, 1
      %v409 = vsel %vm262, %v407, 0
      %v412 = vsel %vm266, %v403, 0
      %414 = vmatpush.bf16.msra.mxu0 0
      %415 = vmatpush.bf16.msra.mxu0 0
      %416 = vmatpush.bf16.msra.mxu0 0
      %417 = vmatpush.bf16.msra.mxu0 0
      %418 = vmatpush.bf16.msra.mxu0 0
      %419 = vmatpush.bf16.msra.mxu0 0
      %420 = vmatpush.bf16.msra.mxu0 0
      %421 = vmatpush.bf16.msra.mxu0 %v412
      %422 = vmatmul.bf16.gmra.mxu0 %v409
      %v423 = vpop.f32.mrf.mxu0
      %v424 = vadd.f32 0.0, %v423
      %v425 = vpop.f32.mrf.mxu0
      %426 = vdwg.mxu0
      %v427 = vadd.f32 %v400, %v424
      %v428 = vld [vmem:[%s253 + $0x4] sm:$0x3]
      %s429 = scalar_lea.vmem %s1, 12
      %v430 = vld [vmem:[%s429] sm:$0x3]
      %v432 = vunpack.c.l.b16 %v428
      %v433 = vpack.c.b16 %v432, %v378
      %v435 = vshrl.u32 %v433, 16
      %v437 = vrot.slane %v435, 1
      %v438 = vshll.u32 %v433, 16
      %v440 = vrot.slane %v438, 2
      %v441 = vor.u32 %v437, %v440
      %v443 = vsel %vm262, %v441, 0
      %v446 = vsel %vm266, %v430, 0
      %448 = vmatpush.bf16.msra.mxu0 0
      %449 = vmatpush.bf16.msra.mxu0 0
      %450 = vmatpush.bf16.msra.mxu0 0
      %451 = vmatpush.bf16.msra.mxu0 0
      %452 = vmatpush.bf16.msra.mxu0 0
      %453 = vmatpush.bf16.msra.mxu0 0
      %454 = vmatpush.bf16.msra.mxu0 0
      %455 = vmatpush.bf16.msra.mxu0 %v446
      %456 = vmatmul.bf16.gmra.mxu0 %v443
      %v457 = vpop.f32.mrf.mxu0
      %v458 = vadd.f32 0.0, %v457
      %v459 = vpop.f32.mrf.mxu0
      %460 = vdwg.mxu0
      %v461 = vadd.f32 %v427, %v458
      %s462 = sadd.s32 %s251, 44
      %s463 = smul.addr %s462, 4
      %s464 = scalar_lea.vmem %s240, %s463
      %v465 = vld [vmem:[%s464] sm:$0xf]
      %s466 = scalar_lea.vmem %s1, 14
      %v467 = vld [vmem:[%s466] sm:$0x3]
      %v469 = vsel %vm262, %v465, 0
      %v472 = vsel %vm266, %v467, 0
      %474 = vmatpush.bf16.msra.mxu0 0
      %475 = vmatpush.bf16.msra.mxu0 0
      %476 = vmatpush.bf16.msra.mxu0 0
      %477 = vmatpush.bf16.msra.mxu0 0
      %478 = vmatpush.bf16.msra.mxu0 0
      %479 = vmatpush.bf16.msra.mxu0 0
      %480 = vmatpush.bf16.msra.mxu0 0
      %481 = vmatpush.bf16.msra.mxu0 %v472
      %482 = vmatmul.bf16.gmra.mxu0 %v469
      %v483 = vpop.f32.mrf.mxu0
      %v484 = vadd.f32 0.0, %v483
      %v485 = vpop.f32.mrf.mxu0
      %486 = vdwg.mxu0
      %v487 = vadd.f32 %v461, %v484
      %s488 = sadd.s32 %s251, 66
      %s489 = smul.addr %s488, 4
      %s490 = scalar_lea.vmem %s240, %s489
      %v491 = vld [vmem:[%s490] sm:$0xf]
      %s492 = scalar_lea.vmem %s1, 16
      %v493 = vld [vmem:[%s492] sm:$0x3]
      %v495 = vsel %vm262, %v491, 0
      %v498 = vsel %vm266, %v493, 0
      %500 = vmatpush.bf16.msra.mxu0 0
      %501 = vmatpush.bf16.msra.mxu0 0
      %502 = vmatpush.bf16.msra.mxu0 0
      %503 = vmatpush.bf16.msra.mxu0 0
      %504 = vmatpush.bf16.msra.mxu0 0
      %505 = vmatpush.bf16.msra.mxu0 0
      %506 = vmatpush.bf16.msra.mxu0 0
      %507 = vmatpush.bf16.msra.mxu0 %v498
      %508 = vmatmul.bf16.gmra.mxu0 %v495
      %v509 = vpop.f32.mrf.mxu0
      %v510 = vadd.f32 0.0, %v509
      %v511 = vpop.f32.mrf.mxu0
      %512 = vdwg.mxu0
      %v513 = vadd.f32 %v487, %v510
      %v514 = vld [vmem:[%s464] sm:$0xf]
      %v515 = vld [vmem:[%s464 + $0x4] sm:$0x1]
      %s516 = scalar_lea.vmem %s1, 18
      %v517 = vld [vmem:[%s516] sm:$0x3]
      %v520 = vunpack.c.l.b16 %v514
      %v521 = vunpack.c.l.b16 %v515
      %v522 = vpack.c.b16 %v521, %v520
      %v524 = vshrl.u32 %v522, 16
      %v526 = vshll.u32 %v522, 16
      %v528 = vrot.slane %v526, 1
      %v529 = vor.u32 %v524, %v528
      %v531 = vsel %vm262, %v529, 0
      %v534 = vsel %vm266, %v517, 0
      %536 = vmatpush.bf16.msra.mxu0 0
      %537 = vmatpush.bf16.msra.mxu0 0
      %538 = vmatpush.bf16.msra.mxu0 0
      %539 = vmatpush.bf16.msra.mxu0 0
      %540 = vmatpush.bf16.msra.mxu0 0
      %541 = vmatpush.bf16.msra.mxu0 0
      %542 = vmatpush.bf16.msra.mxu0 0
      %543 = vmatpush.bf16.msra.mxu0 %v534
      %544 = vmatmul.bf16.gmra.mxu0 %v531
      %v545 = vpop.f32.mrf.mxu0
      %v546 = vadd.f32 0.0, %v545
      %v547 = vpop.f32.mrf.mxu0
      %548 = vdwg.mxu0
      %v549 = vadd.f32 %v513, %v546
      %v550 = vld [vmem:[%s490] sm:$0xf]
      %v551 = vld [vmem:[%s490 + $0x4] sm:$0x1]
      %s552 = scalar_lea.vmem %s1, 20
      %v553 = vld [vmem:[%s552] sm:$0x3]
      %v556 = vunpack.c.l.b16 %v550
      %v557 = vunpack.c.l.b16 %v551
      %v558 = vpack.c.b16 %v557, %v556
      %v560 = vshrl.u32 %v558, 16
      %v562 = vshll.u32 %v558, 16
      %v564 = vrot.slane %v562, 1
      %v565 = vor.u32 %v560, %v564
      %v567 = vsel %vm262, %v565, 0
      %v570 = vsel %vm266, %v553, 0
      %572 = vmatpush.bf16.msra.mxu0 0
      %573 = vmatpush.bf16.msra.mxu0 0
      %574 = vmatpush.bf16.msra.mxu0 0
      %575 = vmatpush.bf16.msra.mxu0 0
      %576 = vmatpush.bf16.msra.mxu0 0
      %577 = vmatpush.bf16.msra.mxu0 0
      %578 = vmatpush.bf16.msra.mxu0 0
      %579 = vmatpush.bf16.msra.mxu0 %v570
      %580 = vmatmul.bf16.gmra.mxu0 %v567
      %v581 = vpop.f32.mrf.mxu0
      %v582 = vadd.f32 0.0, %v581
      %v583 = vpop.f32.mrf.mxu0
      %584 = vdwg.mxu0
      %v585 = vadd.f32 %v549, %v582
      %v586 = vld [vmem:[%s464] sm:$0xe]
      %s587 = scalar_lea.vmem %s1, 22
      %v588 = vld [vmem:[%s587] sm:$0x3]
      %v590 = vunpack.c.l.b16 %v586
      %v591 = vpack.c.b16 %v521, %v590
      %v592 = vrot.slane %v591, 1
      %v594 = vsel %vm262, %v592, 0
      %v597 = vsel %vm266, %v588, 0
      %599 = vmatpush.bf16.msra.mxu0 0
      %600 = vmatpush.bf16.msra.mxu0 0
      %601 = vmatpush.bf16.msra.mxu0 0
      %602 = vmatpush.bf16.msra.mxu0 0
      %603 = vmatpush.bf16.msra.mxu0 0
      %604 = vmatpush.bf16.msra.mxu0 0
      %605 = vmatpush.bf16.msra.mxu0 0
      %606 = vmatpush.bf16.msra.mxu0 %v597
      %607 = vmatmul.bf16.gmra.mxu0 %v594
      %v608 = vpop.f32.mrf.mxu0
      %v609 = vadd.f32 0.0, %v608
      %v610 = vpop.f32.mrf.mxu0
      %611 = vdwg.mxu0
      %v612 = vadd.f32 %v585, %v609
      %v613 = vld [vmem:[%s490] sm:$0xe]
      %s614 = scalar_lea.vmem %s1, 24
      %v615 = vld [vmem:[%s614] sm:$0x3]
      %v617 = vunpack.c.l.b16 %v613
      %v618 = vpack.c.b16 %v557, %v617
      %v619 = vrot.slane %v618, 1
      %v621 = vsel %vm262, %v619, 0
      %v624 = vsel %vm266, %v615, 0
      %626 = vmatpush.bf16.msra.mxu0 0
      %627 = vmatpush.bf16.msra.mxu0 0
      %628 = vmatpush.bf16.msra.mxu0 0
      %629 = vmatpush.bf16.msra.mxu0 0
      %630 = vmatpush.bf16.msra.mxu0 0
      %631 = vmatpush.bf16.msra.mxu0 0
      %632 = vmatpush.bf16.msra.mxu0 0
      %633 = vmatpush.bf16.msra.mxu0 %v624
      %634 = vmatmul.bf16.gmra.mxu0 %v621
      %v635 = vpop.f32.mrf.mxu0
      %v636 = vadd.f32 0.0, %v635
      %v637 = vpop.f32.mrf.mxu0
      %638 = vdwg.mxu0
      %v639 = vadd.f32 %v612, %v636
      %v640 = vld [vmem:[%s464 + $0x4] sm:$0x3]
      %s641 = scalar_lea.vmem %s1, 26
      %v642 = vld [vmem:[%s641] sm:$0x3]
      %v644 = vunpack.c.l.b16 %v640
      %v645 = vpack.c.b16 %v644, %v590
      %v647 = vshrl.u32 %v645, 16
      %v649 = vrot.slane %v647, 1
      %v650 = vshll.u32 %v645, 16
      %v652 = vrot.slane %v650, 2
      %v653 = vor.u32 %v649, %v652
      %v655 = vsel %vm262, %v653, 0
      %v658 = vsel %vm266, %v642, 0
      %660 = vmatpush.bf16.msra.mxu0 0
      %661 = vmatpush.bf16.msra.mxu0 0
      %662 = vmatpush.bf16.msra.mxu0 0
      %663 = vmatpush.bf16.msra.mxu0 0
      %664 = vmatpush.bf16.msra.mxu0 0
      %665 = vmatpush.bf16.msra.mxu0 0
      %666 = vmatpush.bf16.msra.mxu0 0
      %667 = vmatpush.bf16.msra.mxu0 %v658
      %668 = vmatmul.bf16.gmra.mxu0 %v655
      %v669 = vpop.f32.mrf.mxu0
      %v670 = vadd.f32 0.0, %v669
      %v671 = vpop.f32.mrf.mxu0
      %672 = vdwg.mxu0
      %v673 = vadd.f32 %v639, %v670
      %s674 = sadd.s32 %s21, 1
      %s675 = smul.u32 %s674, 2
      %s676 = smul.addr %s675, 4
      %s677 = scalar_lea.vmem %s240, %s676
      %v678 = vld [vmem:[%s677] sm:$0xf]
      %s679 = scalar_lea.vmem %s1, 28
      %v680 = vld [vmem:[%s679] sm:$0x3]
      %v682 = vsel %vm262, %v678, 0
      %v685 = vsel %vm266, %v680, 0
      %687 = vmatpush.bf16.msra.mxu0 0
      %688 = vmatpush.bf16.msra.mxu0 0
      %689 = vmatpush.bf16.msra.mxu0 0
      %690 = vmatpush.bf16.msra.mxu0 0
      %691 = vmatpush.bf16.msra.mxu0 0
      %692 = vmatpush.bf16.msra.mxu0 0
      %693 = vmatpush.bf16.msra.mxu0 0
      %694 = vmatpush.bf16.msra.mxu0 %v685
      %695 = vmatmul.bf16.gmra.mxu0 %v682
      %v696 = vpop.f32.mrf.mxu0
      %v697 = vadd.f32 0.0, %v696
      %v698 = vpop.f32.mrf.mxu0
      %699 = vdwg.mxu0
      %v700 = vadd.f32 %v673, %v697
      %s701 = sadd.s32 %s675, 22
      %s702 = smul.addr %s701, 4
      %s703 = scalar_lea.vmem %s240, %s702
      %v704 = vld [vmem:[%s703] sm:$0xf]
      %s705 = scalar_lea.vmem %s1, 30
      %v706 = vld [vmem:[%s705] sm:$0x3]
      %v708 = vsel %vm262, %v704, 0
      %v711 = vsel %vm266, %v706, 0
      %713 = vmatpush.bf16.msra.mxu0 0
      %714 = vmatpush.bf16.msra.mxu0 0
      %715 = vmatpush.bf16.msra.mxu0 0
      %716 = vmatpush.bf16.msra.mxu0 0
      %717 = vmatpush.bf16.msra.mxu0 0
      %718 = vmatpush.bf16.msra.mxu0 0
      %719 = vmatpush.bf16.msra.mxu0 0
      %720 = vmatpush.bf16.msra.mxu0 %v711
      %721 = vmatmul.bf16.gmra.mxu0 %v708
      %v722 = vpop.f32.mrf.mxu0
      %v723 = vadd.f32 0.0, %v722
      %v724 = vpop.f32.mrf.mxu0
      %725 = vdwg.mxu0
      %v726 = vadd.f32 %v700, %v723
      %v727 = vld [vmem:[%s677] sm:$0xf]
      %v728 = vld [vmem:[%s677 + $0x4] sm:$0x1]
      %s729 = scalar_lea.vmem %s1, 32
      %v730 = vld [vmem:[%s729] sm:$0x3]
      %v733 = vunpack.c.l.b16 %v727
      %v734 = vunpack.c.l.b16 %v728
      %v735 = vpack.c.b16 %v734, %v733
      %v737 = vshrl.u32 %v735, 16
      %v739 = vshll.u32 %v735, 16
      %v741 = vrot.slane %v739, 1
      %v742 = vor.u32 %v737, %v741
      %v744 = vsel %vm262, %v742, 0
      %v747 = vsel %vm266, %v730, 0
      %749 = vmatpush.bf16.msra.mxu0 0
      %750 = vmatpush.bf16.msra.mxu0 0
      %751 = vmatpush.bf16.msra.mxu0 0
      %752 = vmatpush.bf16.msra.mxu0 0
      %753 = vmatpush.bf16.msra.mxu0 0
      %754 = vmatpush.bf16.msra.mxu0 0
      %755 = vmatpush.bf16.msra.mxu0 0
      %756 = vmatpush.bf16.msra.mxu0 %v747
      %757 = vmatmul.bf16.gmra.mxu0 %v744
      %v758 = vpop.f32.mrf.mxu0
      %v759 = vadd.f32 0.0, %v758
      %v760 = vpop.f32.mrf.mxu0
      %761 = vdwg.mxu0
      %v762 = vadd.f32 %v726, %v759
      %v763 = vld [vmem:[%s703] sm:$0xf]
      %v764 = vld [vmem:[%s703 + $0x4] sm:$0x1]
      %s765 = scalar_lea.vmem %s1, 34
      %v766 = vld [vmem:[%s765] sm:$0x3]
      %v769 = vunpack.c.l.b16 %v763
      %v770 = vunpack.c.l.b16 %v764
      %v771 = vpack.c.b16 %v770, %v769
      %v773 = vshrl.u32 %v771, 16
      %v775 = vshll.u32 %v771, 16
      %v777 = vrot.slane %v775, 1
      %v778 = vor.u32 %v773, %v777
      %v780 = vsel %vm262, %v778, 0
      %v783 = vsel %vm266, %v766, 0
      %785 = vmatpush.bf16.msra.mxu0 0
      %786 = vmatpush.bf16.msra.mxu0 0
      %787 = vmatpush.bf16.msra.mxu0 0
      %788 = vmatpush.bf16.msra.mxu0 0
      %789 = vmatpush.bf16.msra.mxu0 0
      %790 = vmatpush.bf16.msra.mxu0 0
      %791 = vmatpush.bf16.msra.mxu0 0
      %792 = vmatpush.bf16.msra.mxu0 %v783
      %793 = vmatmul.bf16.gmra.mxu0 %v780
      %v794 = vpop.f32.mrf.mxu0
      %v795 = vadd.f32 0.0, %v794
      %v796 = vpop.f32.mrf.mxu0
      %797 = vdwg.mxu0
      %v798 = vadd.f32 %v762, %v795
      %v799 = vld [vmem:[%s677] sm:$0xe]
      %s800 = scalar_lea.vmem %s1, 36
      %v801 = vld [vmem:[%s800] sm:$0x3]
      %v803 = vunpack.c.l.b16 %v799
      %v804 = vpack.c.b16 %v734, %v803
      %v805 = vrot.slane %v804, 1
      %v807 = vsel %vm262, %v805, 0
      %v810 = vsel %vm266, %v801, 0
      %812 = vmatpush.bf16.msra.mxu0 0
      %813 = vmatpush.bf16.msra.mxu0 0
      %814 = vmatpush.bf16.msra.mxu0 0
      %815 = vmatpush.bf16.msra.mxu0 0
      %816 = vmatpush.bf16.msra.mxu0 0
      %817 = vmatpush.bf16.msra.mxu0 0
      %818 = vmatpush.bf16.msra.mxu0 0
      %819 = vmatpush.bf16.msra.mxu0 %v810
      %820 = vmatmul.bf16.gmra.mxu0 %v807
      %v821 = vpop.f32.mrf.mxu0
      %v822 = vadd.f32 0.0, %v821
      %v823 = vpop.f32.mrf.mxu0
      %824 = vdwg.mxu0
      %v825 = vadd.f32 %v798, %v822
      %v826 = vld [vmem:[%s703] sm:$0xe]
      %s827 = scalar_lea.vmem %s1, 38
      %v828 = vld [vmem:[%s827] sm:$0x3]
      %v830 = vunpack.c.l.b16 %v826
      %v831 = vpack.c.b16 %v770, %v830
      %v832 = vrot.slane %v831, 1
      %v834 = vsel %vm262, %v832, 0
      %v837 = vsel %vm266, %v828, 0
      %839 = vmatpush.bf16.msra.mxu0 0
      %840 = vmatpush.bf16.msra.mxu0 0
      %841 = vmatpush.bf16.msra.mxu0 0
      %842 = vmatpush.bf16.msra.mxu0 0
      %843 = vmatpush.bf16.msra.mxu0 0
      %844 = vmatpush.bf16.msra.mxu0 0
      %845 = vmatpush.bf16.msra.mxu0 0
      %846 = vmatpush.bf16.msra.mxu0 %v837
      %847 = vmatmul.bf16.gmra.mxu0 %v834
      %v848 = vpop.f32.mrf.mxu0
      %v849 = vadd.f32 0.0, %v848
      %v850 = vpop.f32.mrf.mxu0
      %851 = vdwg.mxu0
      %v852 = vadd.f32 %v825, %v849
      %v853 = vld [vmem:[%s677 + $0x4] sm:$0x3]
      %s854 = scalar_lea.vmem %s1, 40
      %v855 = vld [vmem:[%s854] sm:$0x3]
      %v857 = vunpack.c.l.b16 %v853
      %v858 = vpack.c.b16 %v857, %v803
      %v860 = vshrl.u32 %v858, 16
      %v862 = vrot.slane %v860, 1
      %v863 = vshll.u32 %v858, 16
      %v865 = vrot.slane %v863, 2
      %v866 = vor.u32 %v862, %v865
      %v868 = vsel %vm262, %v866, 0
      %v871 = vsel %vm266, %v855, 0
      %873 = vmatpush.bf16.msra.mxu0 0
      %874 = vmatpush.bf16.msra.mxu0 0
      %875 = vmatpush.bf16.msra.mxu0 0
      %876 = vmatpush.bf16.msra.mxu0 0
      %877 = vmatpush.bf16.msra.mxu0 0
      %878 = vmatpush.bf16.msra.mxu0 0
      %879 = vmatpush.bf16.msra.mxu0 0
      %880 = vmatpush.bf16.msra.mxu0 %v871
      %881 = vmatmul.bf16.gmra.mxu0 %v868
      %v882 = vpop.f32.mrf.mxu0
      %v883 = vadd.f32 0.0, %v882
      %v884 = vpop.f32.mrf.mxu0
      %885 = vdwg.mxu0
      %v886 = vadd.f32 %v852, %v883
      %s887 = sadd.s32 %s675, 44
      %s888 = smul.addr %s887, 4
      %s889 = scalar_lea.vmem %s240, %s888
      %v890 = vld [vmem:[%s889] sm:$0xf]
      %s891 = scalar_lea.vmem %s1, 42
      %v892 = vld [vmem:[%s891] sm:$0x3]
      %v894 = vsel %vm262, %v890, 0
      %v897 = vsel %vm266, %v892, 0
      %899 = vmatpush.bf16.msra.mxu0 0
      %900 = vmatpush.bf16.msra.mxu0 0
      %901 = vmatpush.bf16.msra.mxu0 0
      %902 = vmatpush.bf16.msra.mxu0 0
      %903 = vmatpush.bf16.msra.mxu0 0
      %904 = vmatpush.bf16.msra.mxu0 0
      %905 = vmatpush.bf16.msra.mxu0 0
      %906 = vmatpush.bf16.msra.mxu0 %v897
      %907 = vmatmul.bf16.gmra.mxu0 %v894
      %v908 = vpop.f32.mrf.mxu0
      %v909 = vadd.f32 0.0, %v908
      %v910 = vpop.f32.mrf.mxu0
      %911 = vdwg.mxu0
      %v912 = vadd.f32 %v886, %v909
      %s913 = sadd.s32 %s675, 66
      %s914 = smul.addr %s913, 4
      %s915 = scalar_lea.vmem %s240, %s914
      %v916 = vld [vmem:[%s915] sm:$0xf]
      %s917 = scalar_lea.vmem %s1, 44
      %v918 = vld [vmem:[%s917] sm:$0x3]
      %v920 = vsel %vm262, %v916, 0
      %v923 = vsel %vm266, %v918, 0
      %925 = vmatpush.bf16.msra.mxu0 0
      %926 = vmatpush.bf16.msra.mxu0 0
      %927 = vmatpush.bf16.msra.mxu0 0
      %928 = vmatpush.bf16.msra.mxu0 0
      %929 = vmatpush.bf16.msra.mxu0 0
      %930 = vmatpush.bf16.msra.mxu0 0
      %931 = vmatpush.bf16.msra.mxu0 0
      %932 = vmatpush.bf16.msra.mxu0 %v923
      %933 = vmatmul.bf16.gmra.mxu0 %v920
      %v934 = vpop.f32.mrf.mxu0
      %v935 = vadd.f32 0.0, %v934
      %v936 = vpop.f32.mrf.mxu0
      %937 = vdwg.mxu0
      %v938 = vadd.f32 %v912, %v935
      %v939 = vld [vmem:[%s889] sm:$0xf]
      %v940 = vld [vmem:[%s889 + $0x4] sm:$0x1]
      %s941 = scalar_lea.vmem %s1, 46
      %v942 = vld [vmem:[%s941] sm:$0x3]
      %v945 = vunpack.c.l.b16 %v939
      %v946 = vunpack.c.l.b16 %v940
      %v947 = vpack.c.b16 %v946, %v945
      %v949 = vshrl.u32 %v947, 16
      %v951 = vshll.u32 %v947, 16
      %v953 = vrot.slane %v951, 1
      %v954 = vor.u32 %v949, %v953
      %v956 = vsel %vm262, %v954, 0
      %v959 = vsel %vm266, %v942, 0
      %961 = vmatpush.bf16.msra.mxu0 0
      %962 = vmatpush.bf16.msra.mxu0 0
      %963 = vmatpush.bf16.msra.mxu0 0
      %964 = vmatpush.bf16.msra.mxu0 0
      %965 = vmatpush.bf16.msra.mxu0 0
      %966 = vmatpush.bf16.msra.mxu0 0
      %967 = vmatpush.bf16.msra.mxu0 0
      %968 = vmatpush.bf16.msra.mxu0 %v959
      %969 = vmatmul.bf16.gmra.mxu0 %v956
      %v970 = vpop.f32.mrf.mxu0
      %v971 = vadd.f32 0.0, %v970
      %v972 = vpop.f32.mrf.mxu0
      %973 = vdwg.mxu0
      %v974 = vadd.f32 %v938, %v971
      %v975 = vld [vmem:[%s915] sm:$0xf]
      %v976 = vld [vmem:[%s915 + $0x4] sm:$0x1]
      %s977 = scalar_lea.vmem %s1, 48
      %v978 = vld [vmem:[%s977] sm:$0x3]
      %v981 = vunpack.c.l.b16 %v975
      %v982 = vunpack.c.l.b16 %v976
      %v983 = vpack.c.b16 %v982, %v981
      %v985 = vshrl.u32 %v983, 16
      %v987 = vshll.u32 %v983, 16
      %v989 = vrot.slane %v987, 1
      %v990 = vor.u32 %v985, %v989
      %v992 = vsel %vm262, %v990, 0
      %v995 = vsel %vm266, %v978, 0
      %997 = vmatpush.bf16.msra.mxu0 0
      %998 = vmatpush.bf16.msra.mxu0 0
      %999 = vmatpush.bf16.msra.mxu0 0
      %1000 = vmatpush.bf16.msra.mxu0 0
      %1001 = vmatpush.bf16.msra.mxu0 0
      %1002 = vmatpush.bf16.msra.mxu0 0
      %1003 = vmatpush.bf16.msra.mxu0 0
      %1004 = vmatpush.bf16.msra.mxu0 %v995
      %1005 = vmatmul.bf16.gmra.mxu0 %v992
      %v1006 = vpop.f32.mrf.mxu0
      %v1007 = vadd.f32 0.0, %v1006
      %v1008 = vpop.f32.mrf.mxu0
      %1009 = vdwg.mxu0
      %v1010 = vadd.f32 %v974, %v1007
      %v1011 = vld [vmem:[%s889] sm:$0xe]
      %s1012 = scalar_lea.vmem %s1, 50
      %v1013 = vld [vmem:[%s1012] sm:$0x3]
      %v1015 = vunpack.c.l.b16 %v1011
      %v1016 = vpack.c.b16 %v946, %v1015
      %v1017 = vrot.slane %v1016, 1
      %v1019 = vsel %vm262, %v1017, 0
      %v1022 = vsel %vm266, %v1013, 0
      %1024 = vmatpush.bf16.msra.mxu0 0
      %1025 = vmatpush.bf16.msra.mxu0 0
      %1026 = vmatpush.bf16.msra.mxu0 0
      %1027 = vmatpush.bf16.msra.mxu0 0
      %1028 = vmatpush.bf16.msra.mxu0 0
      %1029 = vmatpush.bf16.msra.mxu0 0
      %1030 = vmatpush.bf16.msra.mxu0 0
      %1031 = vmatpush.bf16.msra.mxu0 %v1022
      %1032 = vmatmul.bf16.gmra.mxu0 %v1019
      %v1033 = vpop.f32.mrf.mxu0
      %v1034 = vadd.f32 0.0, %v1033
      %v1035 = vpop.f32.mrf.mxu0
      %1036 = vdwg.mxu0
      %v1037 = vadd.f32 %v1010, %v1034
      %v1038 = vld [vmem:[%s915] sm:$0xe]
      %s1039 = scalar_lea.vmem %s1, 52
      %v1040 = vld [vmem:[%s1039] sm:$0x3]
      %v1042 = vunpack.c.l.b16 %v1038
      %v1043 = vpack.c.b16 %v982, %v1042
      %v1044 = vrot.slane %v1043, 1
      %v1046 = vsel %vm262, %v1044, 0
      %v1049 = vsel %vm266, %v1040, 0
      %1051 = vmatpush.bf16.msra.mxu0 0
      %1052 = vmatpush.bf16.msra.mxu0 0
      %1053 = vmatpush.bf16.msra.mxu0 0
      %1054 = vmatpush.bf16.msra.mxu0 0
      %1055 = vmatpush.bf16.msra.mxu0 0
      %1056 = vmatpush.bf16.msra.mxu0 0
      %1057 = vmatpush.bf16.msra.mxu0 0
      %1058 = vmatpush.bf16.msra.mxu0 %v1049
      %1059 = vmatmul.bf16.gmra.mxu0 %v1046
      %v1060 = vpop.f32.mrf.mxu0
      %v1061 = vadd.f32 0.0, %v1060
      %v1062 = vpop.f32.mrf.mxu0
      %1063 = vdwg.mxu0
      %v1064 = vadd.f32 %v1037, %v1061
      %v1065 = vld [vmem:[%s889 + $0x4] sm:$0x3]
      %s1066 = scalar_lea.vmem %s1, 54
      %v1067 = vld [vmem:[%s1066] sm:$0x3]
      %v1069 = vunpack.c.l.b16 %v1065
      %v1070 = vpack.c.b16 %v1069, %v1015
      %v1072 = vshrl.u32 %v1070, 16
      %v1074 = vrot.slane %v1072, 1
      %v1075 = vshll.u32 %v1070, 16
      %v1077 = vrot.slane %v1075, 2
      %v1078 = vor.u32 %v1074, %v1077
      %v1080 = vsel %vm262, %v1078, 0
      %v1083 = vsel %vm266, %v1067, 0
      %1085 = vmatpush.bf16.msra.mxu0 0
      %1086 = vmatpush.bf16.msra.mxu0 0
      %1087 = vmatpush.bf16.msra.mxu0 0
      %1088 = vmatpush.bf16.msra.mxu0 0
      %1089 = vmatpush.bf16.msra.mxu0 0
      %1090 = vmatpush.bf16.msra.mxu0 0
      %1091 = vmatpush.bf16.msra.mxu0 0
      %1092 = vmatpush.bf16.msra.mxu0 %v1083
      %1093 = vmatmul.bf16.gmra.mxu0 %v1080
      %v1094 = vpop.f32.mrf.mxu0
      %v1095 = vadd.f32 0.0, %v1094
      %v1096 = vpop.f32.mrf.mxu0
      %1097 = vdwg.mxu0
      %v1098 = vadd.f32 %v1064, %v1095
      %s1099 = sadd.s32 %s21, 2
      %s1100 = smul.u32 %s1099, 2
      %s1101 = smul.addr %s1100, 4
      %s1102 = scalar_lea.vmem %s240, %s1101
      %v1103 = vld [vmem:[%s1102] sm:$0xf]
      %s1104 = scalar_lea.vmem %s1, 56
      %v1105 = vld [vmem:[%s1104] sm:$0x3]
      %v1107 = vsel %vm262, %v1103, 0
      %v1110 = vsel %vm266, %v1105, 0
      %1112 = vmatpush.bf16.msra.mxu0 0
      %1113 = vmatpush.bf16.msra.mxu0 0
      %1114 = vmatpush.bf16.msra.mxu0 0
      %1115 = vmatpush.bf16.msra.mxu0 0
      %1116 = vmatpush.bf16.msra.mxu0 0
      %1117 = vmatpush.bf16.msra.mxu0 0
      %1118 = vmatpush.bf16.msra.mxu0 0
      %1119 = vmatpush.bf16.msra.mxu0 %v1110
      %1120 = vmatmul.bf16.gmra.mxu0 %v1107
      %v1121 = vpop.f32.mrf.mxu0
      %v1122 = vadd.f32 0.0, %v1121
      %v1123 = vpop.f32.mrf.mxu0
      %1124 = vdwg.mxu0
      %v1125 = vadd.f32 %v1098, %v1122
      %s1126 = sadd.s32 %s1100, 22
      %s1127 = smul.addr %s1126, 4
      %s1128 = scalar_lea.vmem %s240, %s1127
      %v1129 = vld [vmem:[%s1128] sm:$0xf]
      %s1130 = scalar_lea.vmem %s1, 58
      %v1131 = vld [vmem:[%s1130] sm:$0x3]
      %v1133 = vsel %vm262, %v1129, 0
      %v1136 = vsel %vm266, %v1131, 0
      %1138 = vmatpush.bf16.msra.mxu0 0
      %1139 = vmatpush.bf16.msra.mxu0 0
      %1140 = vmatpush.bf16.msra.mxu0 0
      %1141 = vmatpush.bf16.msra.mxu0 0
      %1142 = vmatpush.bf16.msra.mxu0 0
      %1143 = vmatpush.bf16.msra.mxu0 0
      %1144 = vmatpush.bf16.msra.mxu0 0
      %1145 = vmatpush.bf16.msra.mxu0 %v1136
      %1146 = vmatmul.bf16.gmra.mxu0 %v1133
      %v1147 = vpop.f32.mrf.mxu0
      %v1148 = vadd.f32 0.0, %v1147
      %v1149 = vpop.f32.mrf.mxu0
      %1150 = vdwg.mxu0
      %v1151 = vadd.f32 %v1125, %v1148
      %v1152 = vld [vmem:[%s1102] sm:$0xf]
      %v1153 = vld [vmem:[%s1102 + $0x4] sm:$0x1]
      %s1154 = scalar_lea.vmem %s1, 60
      %v1155 = vld [vmem:[%s1154] sm:$0x3]
      %v1158 = vunpack.c.l.b16 %v1152
      %v1159 = vunpack.c.l.b16 %v1153
      %v1160 = vpack.c.b16 %v1159, %v1158
      %v1162 = vshrl.u32 %v1160, 16
      %v1164 = vshll.u32 %v1160, 16
      %v1166 = vrot.slane %v1164, 1
      %v1167 = vor.u32 %v1162, %v1166
      %v1169 = vsel %vm262, %v1167, 0
      %v1172 = vsel %vm266, %v1155, 0
      %1174 = vmatpush.bf16.msra.mxu0 0
      %1175 = vmatpush.bf16.msra.mxu0 0
      %1176 = vmatpush.bf16.msra.mxu0 0
      %1177 = vmatpush.bf16.msra.mxu0 0
      %1178 = vmatpush.bf16.msra.mxu0 0
      %1179 = vmatpush.bf16.msra.mxu0 0
      %1180 = vmatpush.bf16.msra.mxu0 0
      %1181 = vmatpush.bf16.msra.mxu0 %v1172
      %1182 = vmatmul.bf16.gmra.mxu0 %v1169
      %v1183 = vpop.f32.mrf.mxu0
      %v1184 = vadd.f32 0.0, %v1183
      %v1185 = vpop.f32.mrf.mxu0
      %1186 = vdwg.mxu0
      %v1187 = vadd.f32 %v1151, %v1184
      %v1188 = vld [vmem:[%s1128] sm:$0xf]
      %v1189 = vld [vmem:[%s1128 + $0x4] sm:$0x1]
      %s1190 = scalar_lea.vmem %s1, 62
      %v1191 = vld [vmem:[%s1190] sm:$0x3]
      %v1194 = vunpack.c.l.b16 %v1188
      %v1195 = vunpack.c.l.b16 %v1189
      %v1196 = vpack.c.b16 %v1195, %v1194
      %v1198 = vshrl.u32 %v1196, 16
      %v1200 = vshll.u32 %v1196, 16
      %v1202 = vrot.slane %v1200, 1
      %v1203 = vor.u32 %v1198, %v1202
      %v1205 = vsel %vm262, %v1203, 0
      %v1208 = vsel %vm266, %v1191, 0
      %1210 = vmatpush.bf16.msra.mxu0 0
      %1211 = vmatpush.bf16.msra.mxu0 0
      %1212 = vmatpush.bf16.msra.mxu0 0
      %1213 = vmatpush.bf16.msra.mxu0 0
      %1214 = vmatpush.bf16.msra.mxu0 0
      %1215 = vmatpush.bf16.msra.mxu0 0
      %1216 = vmatpush.bf16.msra.mxu0 0
      %1217 = vmatpush.bf16.msra.mxu0 %v1208
      %1218 = vmatmul.bf16.gmra.mxu0 %v1205
      %v1219 = vpop.f32.mrf.mxu0
      %v1220 = vadd.f32 0.0, %v1219
      %v1221 = vpop.f32.mrf.mxu0
      %1222 = vdwg.mxu0
      %v1223 = vadd.f32 %v1187, %v1220
      %v1224 = vld [vmem:[%s1102] sm:$0xe]
      %s1225 = scalar_lea.vmem %s1, 64
      %v1226 = vld [vmem:[%s1225] sm:$0x3]
      %v1228 = vunpack.c.l.b16 %v1224
      %v1229 = vpack.c.b16 %v1159, %v1228
      %v1230 = vrot.slane %v1229, 1
      %v1232 = vsel %vm262, %v1230, 0
      %v1235 = vsel %vm266, %v1226, 0
      %1237 = vmatpush.bf16.msra.mxu0 0
      %1238 = vmatpush.bf16.msra.mxu0 0
      %1239 = vmatpush.bf16.msra.mxu0 0
      %1240 = vmatpush.bf16.msra.mxu0 0
      %1241 = vmatpush.bf16.msra.mxu0 0
      %1242 = vmatpush.bf16.msra.mxu0 0
      %1243 = vmatpush.bf16.msra.mxu0 0
      %1244 = vmatpush.bf16.msra.mxu0 %v1235
      %1245 = vmatmul.bf16.gmra.mxu0 %v1232
      %v1246 = vpop.f32.mrf.mxu0
      %v1247 = vadd.f32 0.0, %v1246
      %v1248 = vpop.f32.mrf.mxu0
      %1249 = vdwg.mxu0
      %v1250 = vadd.f32 %v1223, %v1247
      %v1251 = vld [vmem:[%s1128] sm:$0xe]
      %s1252 = scalar_lea.vmem %s1, 66
      %v1253 = vld [vmem:[%s1252] sm:$0x3]
      %v1255 = vunpack.c.l.b16 %v1251
      %v1256 = vpack.c.b16 %v1195, %v1255
      %v1257 = vrot.slane %v1256, 1
      %v1259 = vsel %vm262, %v1257, 0
      %v1262 = vsel %vm266, %v1253, 0
      %1264 = vmatpush.bf16.msra.mxu0 0
      %1265 = vmatpush.bf16.msra.mxu0 0
      %1266 = vmatpush.bf16.msra.mxu0 0
      %1267 = vmatpush.bf16.msra.mxu0 0
      %1268 = vmatpush.bf16.msra.mxu0 0
      %1269 = vmatpush.bf16.msra.mxu0 0
      %1270 = vmatpush.bf16.msra.mxu0 0
      %1271 = vmatpush.bf16.msra.mxu0 %v1262
      %1272 = vmatmul.bf16.gmra.mxu0 %v1259
      %v1273 = vpop.f32.mrf.mxu0
      %v1274 = vadd.f32 0.0, %v1273
      %v1275 = vpop.f32.mrf.mxu0
      %1276 = vdwg.mxu0
      %v1277 = vadd.f32 %v1250, %v1274
      %v1278 = vld [vmem:[%s1102 + $0x4] sm:$0x3]
      %s1279 = scalar_lea.vmem %s1, 68
      %v1280 = vld [vmem:[%s1279] sm:$0x3]
      %v1282 = vunpack.c.l.b16 %v1278
      %v1283 = vpack.c.b16 %v1282, %v1228
      %v1285 = vshrl.u32 %v1283, 16
      %v1287 = vrot.slane %v1285, 1
      %v1288 = vshll.u32 %v1283, 16
      %v1290 = vrot.slane %v1288, 2
      %v1291 = vor.u32 %v1287, %v1290
      %v1293 = vsel %vm262, %v1291, 0
      %v1296 = vsel %vm266, %v1280, 0
      %1298 = vmatpush.bf16.msra.mxu0 0
      %1299 = vmatpush.bf16.msra.mxu0 0
      %1300 = vmatpush.bf16.msra.mxu0 0
      %1301 = vmatpush.bf16.msra.mxu0 0
      %1302 = vmatpush.bf16.msra.mxu0 0
      %1303 = vmatpush.bf16.msra.mxu0 0
      %1304 = vmatpush.bf16.msra.mxu0 0
      %1305 = vmatpush.bf16.msra.mxu0 %v1296
      %1306 = vmatmul.bf16.gmra.mxu0 %v1293
      %v1307 = vpop.f32.mrf.mxu0
      %v1308 = vadd.f32 0.0, %v1307
      %v1309 = vpop.f32.mrf.mxu0
      %1310 = vdwg.mxu0
      %v1311 = vadd.f32 %v1277, %v1308
      %s1312 = sadd.s32 %s1100, 44
      %s1313 = smul.addr %s1312, 4
      %s1314 = scalar_lea.vmem %s240, %s1313
      %v1315 = vld [vmem:[%s1314] sm:$0xf]
      %s1316 = scalar_lea.vmem %s1, 70
      %v1317 = vld [vmem:[%s1316] sm:$0x3]
      %v1319 = vsel %vm262, %v1315, 0
      %v1322 = vsel %vm266, %v1317, 0
      %1324 = vmatpush.bf16.msra.mxu0 0
      %1325 = vmatpush.bf16.msra.mxu0 0
      %1326 = vmatpush.bf16.msra.mxu0 0
      %1327 = vmatpush.bf16.msra.mxu0 0
      %1328 = vmatpush.bf16.msra.mxu0 0
      %1329 = vmatpush.bf16.msra.mxu0 0
      %1330 = vmatpush.bf16.msra.mxu0 0
      %1331 = vmatpush.bf16.msra.mxu0 %v1322
      %1332 = vmatmul.bf16.gmra.mxu0 %v1319
      %v1333 = vpop.f32.mrf.mxu0
      %v1334 = vadd.f32 0.0, %v1333
      %v1335 = vpop.f32.mrf.mxu0
      %1336 = vdwg.mxu0
      %v1337 = vadd.f32 %v1311, %v1334
      %s1338 = sadd.s32 %s1100, 66
      %s1339 = smul.addr %s1338, 4
      %s1340 = scalar_lea.vmem %s240, %s1339
      %v1341 = vld [vmem:[%s1340] sm:$0xf]
      %s1342 = scalar_lea.vmem %s1, 72
      %v1343 = vld [vmem:[%s1342] sm:$0x3]
      %v1345 = vsel %vm262, %v1341, 0
      %v1348 = vsel %vm266, %v1343, 0
      %1350 = vmatpush.bf16.msra.mxu0 0
      %1351 = vmatpush.bf16.msra.mxu0 0
      %1352 = vmatpush.bf16.msra.mxu0 0
      %1353 = vmatpush.bf16.msra.mxu0 0
      %1354 = vmatpush.bf16.msra.mxu0 0
      %1355 = vmatpush.bf16.msra.mxu0 0
      %1356 = vmatpush.bf16.msra.mxu0 0
      %1357 = vmatpush.bf16.msra.mxu0 %v1348
      %1358 = vmatmul.bf16.gmra.mxu0 %v1345
      %v1359 = vpop.f32.mrf.mxu0
      %v1360 = vadd.f32 0.0, %v1359
      %v1361 = vpop.f32.mrf.mxu0
      %1362 = vdwg.mxu0
      %v1363 = vadd.f32 %v1337, %v1360
      %v1364 = vld [vmem:[%s1314] sm:$0xf]
      %v1365 = vld [vmem:[%s1314 + $0x4] sm:$0x1]
      %s1366 = scalar_lea.vmem %s1, 74
      %v1367 = vld [vmem:[%s1366] sm:$0x3]
      %v1370 = vunpack.c.l.b16 %v1364
      %v1371 = vunpack.c.l.b16 %v1365
      %v1372 = vpack.c.b16 %v1371, %v1370
      %v1374 = vshrl.u32 %v1372, 16
      %v1376 = vshll.u32 %v1372, 16
      %v1378 = vrot.slane %v1376, 1
      %v1379 = vor.u32 %v1374, %v1378
      %v1381 = vsel %vm262, %v1379, 0
      %v1384 = vsel %vm266, %v1367, 0
      %1386 = vmatpush.bf16.msra.mxu0 0
      %1387 = vmatpush.bf16.msra.mxu0 0
      %1388 = vmatpush.bf16.msra.mxu0 0
      %1389 = vmatpush.bf16.msra.mxu0 0
      %1390 = vmatpush.bf16.msra.mxu0 0
      %1391 = vmatpush.bf16.msra.mxu0 0
      %1392 = vmatpush.bf16.msra.mxu0 0
      %1393 = vmatpush.bf16.msra.mxu0 %v1384
      %1394 = vmatmul.bf16.gmra.mxu0 %v1381
      %v1395 = vpop.f32.mrf.mxu0
      %v1396 = vadd.f32 0.0, %v1395
      %v1397 = vpop.f32.mrf.mxu0
      %1398 = vdwg.mxu0
      %v1399 = vadd.f32 %v1363, %v1396
      %v1400 = vld [vmem:[%s1340] sm:$0xf]
      %v1401 = vld [vmem:[%s1340 + $0x4] sm:$0x1]
      %s1402 = scalar_lea.vmem %s1, 76
      %v1403 = vld [vmem:[%s1402] sm:$0x3]
      %v1406 = vunpack.c.l.b16 %v1400
      %v1407 = vunpack.c.l.b16 %v1401
      %v1408 = vpack.c.b16 %v1407, %v1406
      %v1410 = vshrl.u32 %v1408, 16
      %v1412 = vshll.u32 %v1408, 16
      %v1414 = vrot.slane %v1412, 1
      %v1415 = vor.u32 %v1410, %v1414
      %v1417 = vsel %vm262, %v1415, 0
      %v1420 = vsel %vm266, %v1403, 0
      %1422 = vmatpush.bf16.msra.mxu0 0
      %1423 = vmatpush.bf16.msra.mxu0 0
      %1424 = vmatpush.bf16.msra.mxu0 0
      %1425 = vmatpush.bf16.msra.mxu0 0
      %1426 = vmatpush.bf16.msra.mxu0 0
      %1427 = vmatpush.bf16.msra.mxu0 0
      %1428 = vmatpush.bf16.msra.mxu0 0
      %1429 = vmatpush.bf16.msra.mxu0 %v1420
      %1430 = vmatmul.bf16.gmra.mxu0 %v1417
      %v1431 = vpop.f32.mrf.mxu0
      %v1432 = vadd.f32 0.0, %v1431
      %v1433 = vpop.f32.mrf.mxu0
      %1434 = vdwg.mxu0
      %v1435 = vadd.f32 %v1399, %v1432
      %v1436 = vld [vmem:[%s1314] sm:$0xe]
      %s1437 = scalar_lea.vmem %s1, 78
      %v1438 = vld [vmem:[%s1437] sm:$0x3]
      %v1440 = vunpack.c.l.b16 %v1436
      %v1441 = vpack.c.b16 %v1371, %v1440
      %v1442 = vrot.slane %v1441, 1
      %v1444 = vsel %vm262, %v1442, 0
      %v1447 = vsel %vm266, %v1438, 0
      %1449 = vmatpush.bf16.msra.mxu0 0
      %1450 = vmatpush.bf16.msra.mxu0 0
      %1451 = vmatpush.bf16.msra.mxu0 0
      %1452 = vmatpush.bf16.msra.mxu0 0
      %1453 = vmatpush.bf16.msra.mxu0 0
      %1454 = vmatpush.bf16.msra.mxu0 0
      %1455 = vmatpush.bf16.msra.mxu0 0
      %1456 = vmatpush.bf16.msra.mxu0 %v1447
      %1457 = vmatmul.bf16.gmra.mxu0 %v1444
      %v1458 = vpop.f32.mrf.mxu0
      %v1459 = vadd.f32 0.0, %v1458
      %v1460 = vpop.f32.mrf.mxu0
      %1461 = vdwg.mxu0
      %v1462 = vadd.f32 %v1435, %v1459
      %v1463 = vld [vmem:[%s1340] sm:$0xe]
      %s1464 = scalar_lea.vmem %s1, 80
      %v1465 = vld [vmem:[%s1464] sm:$0x3]
      %v1467 = vunpack.c.l.b16 %v1463
      %v1468 = vpack.c.b16 %v1407, %v1467
      %v1469 = vrot.slane %v1468, 1
      %v1471 = vsel %vm262, %v1469, 0
      %v1474 = vsel %vm266, %v1465, 0
      %1476 = vmatpush.bf16.msra.mxu0 0
      %1477 = vmatpush.bf16.msra.mxu0 0
      %1478 = vmatpush.bf16.msra.mxu0 0
      %1479 = vmatpush.bf16.msra.mxu0 0
      %1480 = vmatpush.bf16.msra.mxu0 0
      %1481 = vmatpush.bf16.msra.mxu0 0
      %1482 = vmatpush.bf16.msra.mxu0 0
      %1483 = vmatpush.bf16.msra.mxu0 %v1474
      %1484 = vmatmul.bf16.gmra.mxu0 %v1471
      %v1485 = vpop.f32.mrf.mxu0
      %v1486 = vadd.f32 0.0, %v1485
      %v1487 = vpop.f32.mrf.mxu0
      %1488 = vdwg.mxu0
      %v1489 = vadd.f32 %v1462, %v1486
      %v1490 = vld [vmem:[%s1314 + $0x4] sm:$0x3]
      %s1491 = scalar_lea.vmem %s1, 82
      %v1492 = vld [vmem:[%s1491] sm:$0x3]
      %v1494 = vunpack.c.l.b16 %v1490
      %v1495 = vpack.c.b16 %v1494, %v1440
      %v1497 = vshrl.u32 %v1495, 16
      %v1499 = vrot.slane %v1497, 1
      %v1500 = vshll.u32 %v1495, 16
      %v1502 = vrot.slane %v1500, 2
      %v1503 = vor.u32 %v1499, %v1502
      %v1505 = vsel %vm262, %v1503, 0
      %v1508 = vsel %vm266, %v1492, 0
      %1510 = vmatpush.bf16.msra.mxu0 0
      %1511 = vmatpush.bf16.msra.mxu0 0
      %1512 = vmatpush.bf16.msra.mxu0 0
      %1513 = vmatpush.bf16.msra.mxu0 0
      %1514 = vmatpush.bf16.msra.mxu0 0
      %1515 = vmatpush.bf16.msra.mxu0 0
      %1516 = vmatpush.bf16.msra.mxu0 0
      %1517 = vmatpush.bf16.msra.mxu0 %v1508
      %1518 = vmatmul.bf16.gmra.mxu0 %v1505
      %v1519 = vpop.f32.mrf.mxu0
      %v1520 = vadd.f32 0.0, %v1519
      %v1521 = vpop.f32.mrf.mxu0
      %1522 = vdwg.mxu0
      %v1523 = vadd.f32 %v1489, %v1520
      %s1524 = sadd.s32 %s21, 3
      %s1525 = smul.u32 %s1524, 2
      %s1526 = smul.addr %s1525, 4
      %s1527 = scalar_lea.vmem %s240, %s1526
      %v1528 = vld [vmem:[%s1527] sm:$0xf]
      %s1529 = scalar_lea.vmem %s1, 84
      %v1530 = vld [vmem:[%s1529] sm:$0x3]
      %v1532 = vsel %vm262, %v1528, 0
      %v1535 = vsel %vm266, %v1530, 0
      %1537 = vmatpush.bf16.msra.mxu0 0
      %1538 = vmatpush.bf16.msra.mxu0 0
      %1539 = vmatpush.bf16.msra.mxu0 0
      %1540 = vmatpush.bf16.msra.mxu0 0
      %1541 = vmatpush.bf16.msra.mxu0 0
      %1542 = vmatpush.bf16.msra.mxu0 0
      %1543 = vmatpush.bf16.msra.mxu0 0
      %1544 = vmatpush.bf16.msra.mxu0 %v1535
      %1545 = vmatmul.bf16.gmra.mxu0 %v1532
      %v1546 = vpop.f32.mrf.mxu0
      %v1547 = vadd.f32 0.0, %v1546
      %v1548 = vpop.f32.mrf.mxu0
      %1549 = vdwg.mxu0
      %v1550 = vadd.f32 %v1523, %v1547
      %s1551 = sadd.s32 %s1525, 22
      %s1552 = smul.addr %s1551, 4
      %s1553 = scalar_lea.vmem %s240, %s1552
      %v1554 = vld [vmem:[%s1553] sm:$0xf]
      %s1555 = scalar_lea.vmem %s1, 86
      %v1556 = vld [vmem:[%s1555] sm:$0x3]
      %v1558 = vsel %vm262, %v1554, 0
      %v1561 = vsel %vm266, %v1556, 0
      %1563 = vmatpush.bf16.msra.mxu0 0
      %1564 = vmatpush.bf16.msra.mxu0 0
      %1565 = vmatpush.bf16.msra.mxu0 0
      %1566 = vmatpush.bf16.msra.mxu0 0
      %1567 = vmatpush.bf16.msra.mxu0 0
      %1568 = vmatpush.bf16.msra.mxu0 0
      %1569 = vmatpush.bf16.msra.mxu0 0
      %1570 = vmatpush.bf16.msra.mxu0 %v1561
      %1571 = vmatmul.bf16.gmra.mxu0 %v1558
      %v1572 = vpop.f32.mrf.mxu0
      %v1573 = vadd.f32 0.0, %v1572
      %v1574 = vpop.f32.mrf.mxu0
      %1575 = vdwg.mxu0
      %v1576 = vadd.f32 %v1550, %v1573
      %v1577 = vld [vmem:[%s1527] sm:$0xf]
      %v1578 = vld [vmem:[%s1527 + $0x4] sm:$0x1]
      %s1579 = scalar_lea.vmem %s1, 88
      %v1580 = vld [vmem:[%s1579] sm:$0x3]
      %v1583 = vunpack.c.l.b16 %v1577
      %v1584 = vunpack.c.l.b16 %v1578
      %v1585 = vpack.c.b16 %v1584, %v1583
      %v1587 = vshrl.u32 %v1585, 16
      %v1589 = vshll.u32 %v1585, 16
      %v1591 = vrot.slane %v1589, 1
      %v1592 = vor.u32 %v1587, %v1591
      %v1594 = vsel %vm262, %v1592, 0
      %v1597 = vsel %vm266, %v1580, 0
      %1599 = vmatpush.bf16.msra.mxu0 0
      %1600 = vmatpush.bf16.msra.mxu0 0
      %1601 = vmatpush.bf16.msra.mxu0 0
      %1602 = vmatpush.bf16.msra.mxu0 0
      %1603 = vmatpush.bf16.msra.mxu0 0
      %1604 = vmatpush.bf16.msra.mxu0 0
      %1605 = vmatpush.bf16.msra.mxu0 0
      %1606 = vmatpush.bf16.msra.mxu0 %v1597
      %1607 = vmatmul.bf16.gmra.mxu0 %v1594
      %v1608 = vpop.f32.mrf.mxu0
      %v1609 = vadd.f32 0.0, %v1608
      %v1610 = vpop.f32.mrf.mxu0
      %1611 = vdwg.mxu0
      %v1612 = vadd.f32 %v1576, %v1609
      %v1613 = vld [vmem:[%s1553] sm:$0xf]
      %v1614 = vld [vmem:[%s1553 + $0x4] sm:$0x1]
      %s1615 = scalar_lea.vmem %s1, 90
      %v1616 = vld [vmem:[%s1615] sm:$0x3]
      %v1619 = vunpack.c.l.b16 %v1613
      %v1620 = vunpack.c.l.b16 %v1614
      %v1621 = vpack.c.b16 %v1620, %v1619
      %v1623 = vshrl.u32 %v1621, 16
      %v1625 = vshll.u32 %v1621, 16
      %v1627 = vrot.slane %v1625, 1
      %v1628 = vor.u32 %v1623, %v1627
      %v1630 = vsel %vm262, %v1628, 0
      %v1633 = vsel %vm266, %v1616, 0
      %1635 = vmatpush.bf16.msra.mxu0 0
      %1636 = vmatpush.bf16.msra.mxu0 0
      %1637 = vmatpush.bf16.msra.mxu0 0
      %1638 = vmatpush.bf16.msra.mxu0 0
      %1639 = vmatpush.bf16.msra.mxu0 0
      %1640 = vmatpush.bf16.msra.mxu0 0
      %1641 = vmatpush.bf16.msra.mxu0 0
      %1642 = vmatpush.bf16.msra.mxu0 %v1633
      %1643 = vmatmul.bf16.gmra.mxu0 %v1630
      %v1644 = vpop.f32.mrf.mxu0
      %v1645 = vadd.f32 0.0, %v1644
      %v1646 = vpop.f32.mrf.mxu0
      %1647 = vdwg.mxu0
      %v1648 = vadd.f32 %v1612, %v1645
      %v1649 = vld [vmem:[%s1527] sm:$0xe]
      %s1650 = scalar_lea.vmem %s1, 92
      %v1651 = vld [vmem:[%s1650] sm:$0x3]
      %v1653 = vunpack.c.l.b16 %v1649
      %v1654 = vpack.c.b16 %v1584, %v1653
      %v1655 = vrot.slane %v1654, 1
      %v1657 = vsel %vm262, %v1655, 0
      %v1660 = vsel %vm266, %v1651, 0
      %1662 = vmatpush.bf16.msra.mxu0 0
      %1663 = vmatpush.bf16.msra.mxu0 0
      %1664 = vmatpush.bf16.msra.mxu0 0
      %1665 = vmatpush.bf16.msra.mxu0 0
      %1666 = vmatpush.bf16.msra.mxu0 0
      %1667 = vmatpush.bf16.msra.mxu0 0
      %1668 = vmatpush.bf16.msra.mxu0 0
      %1669 = vmatpush.bf16.msra.mxu0 %v1660
      %1670 = vmatmul.bf16.gmra.mxu0 %v1657
      %v1671 = vpop.f32.mrf.mxu0
      %v1672 = vadd.f32 0.0, %v1671
      %v1673 = vpop.f32.mrf.mxu0
      %1674 = vdwg.mxu0
      %v1675 = vadd.f32 %v1648, %v1672
      %v1676 = vld [vmem:[%s1553] sm:$0xe]
      %s1677 = scalar_lea.vmem %s1, 94
      %v1678 = vld [vmem:[%s1677] sm:$0x3]
      %v1680 = vunpack.c.l.b16 %v1676
      %v1681 = vpack.c.b16 %v1620, %v1680
      %v1682 = vrot.slane %v1681, 1
      %v1684 = vsel %vm262, %v1682, 0
      %v1687 = vsel %vm266, %v1678, 0
      %1689 = vmatpush.bf16.msra.mxu0 0
      %1690 = vmatpush.bf16.msra.mxu0 0
      %1691 = vmatpush.bf16.msra.mxu0 0
      %1692 = vmatpush.bf16.msra.mxu0 0
      %1693 = vmatpush.bf16.msra.mxu0 0
      %1694 = vmatpush.bf16.msra.mxu0 0
      %1695 = vmatpush.bf16.msra.mxu0 0
      %1696 = vmatpush.bf16.msra.mxu0 %v1687
      %1697 = vmatmul.bf16.gmra.mxu0 %v1684
      %v1698 = vpop.f32.mrf.mxu0
      %v1699 = vadd.f32 0.0, %v1698
      %v1700 = vpop.f32.mrf.mxu0
      %1701 = vdwg.mxu0
      %v1702 = vadd.f32 %v1675, %v1699
      %v1703 = vld [vmem:[%s1527 + $0x4] sm:$0x3]
      %s1704 = scalar_lea.vmem %s1, 96
      %v1705 = vld [vmem:[%s1704] sm:$0x3]
      %v1707 = vunpack.c.l.b16 %v1703
      %v1708 = vpack.c.b16 %v1707, %v1653
      %v1710 = vshrl.u32 %v1708, 16
      %v1712 = vrot.slane %v1710, 1
      %v1713 = vshll.u32 %v1708, 16
      %v1715 = vrot.slane %v1713, 2
      %v1716 = vor.u32 %v1712, %v1715
      %v1718 = vsel %vm262, %v1716, 0
      %v1721 = vsel %vm266, %v1705, 0
      %1723 = vmatpush.bf16.msra.mxu0 0
      %1724 = vmatpush.bf16.msra.mxu0 0
      %1725 = vmatpush.bf16.msra.mxu0 0
      %1726 = vmatpush.bf16.msra.mxu0 0
      %1727 = vmatpush.bf16.msra.mxu0 0
      %1728 = vmatpush.bf16.msra.mxu0 0
      %1729 = vmatpush.bf16.msra.mxu0 0
      %1730 = vmatpush.bf16.msra.mxu0 %v1721
      %1731 = vmatmul.bf16.gmra.mxu0 %v1718
      %v1732 = vpop.f32.mrf.mxu0
      %v1733 = vadd.f32 0.0, %v1732
      %v1734 = vpop.f32.mrf.mxu0
      %1735 = vdwg.mxu0
      %v1736 = vadd.f32 %v1702, %v1733
      %v1737 = vld [vmem:[%s2] sm:$0x1]
      %v1739 = vperm.slane %v1737, 0
      %v1741 = vadd.f32 %v1736, %v1739
      %vm1742 = vcmp.gt.f32.partialorder %v1741, 0.0
      %v1743 = vmul.f32 %v1741, 1.442695
      %v1744 = vpow.pop %v1743
      %v1745 = vsub.f32 %v1744, 1.0
      %v1746 = vsel %vm1742, %v1741, %v1745
      %v1747 = vld [vmem:[%s3] sm:$0x1]
      %v1749 = vperm.slane %v1747, 0
      %v1751 = vmul.f32 %v1746, %v1749
      %v1752 = vld [vmem:[%s4] sm:$0x1]
      %v1754 = vperm.slane %v1752, 0
      %v1756 = vadd.f32 %v1751, %v1754
      %1757 = vst [vmem:[%s249] sm:$0xff] %v1756
      %p1758 = scmp.lt.s32.totalorder %s20, 1
      %s1759 = scalar_select %p1758, %s20, 1
      %p1760 = scmp.lt.s32.totalorder %s21, 7
      %s1761 = scalar_select %p1760, %s21, 7
      %s1762 = smul.addr %s1759, 8
      %s1763 = sadd.s32 %s1761, %s1762
      %s1764 = smul.addr %s1763, 8
      %s1765 = scalar_lea.vmem %s5, %s1764
      // Predicated region
      $region41: #{conv_block_forward.1} parent=39 // pred_check
        %p1766 = pneg %p158
      $region42: #{conv_block_forward.1} parent=39 // pred_check_branch
        %1768 = sbr.rel (%p1766) target = $region44
      $region43: #{conv_block_forward.1} parent=39 // pred_region
        _
      $region44: #{conv_block_forward.1} parent=39 // pred_fallthru
        _
    $region40: #{conv_block_forward.1} parent=5 // pred_fallthru
      _
    %p1769 = scmp.le.s32.totalorder 2, %s11
    // Predicated region
    $region45: #{conv_block_forward.1} parent=5 // pred_check
      %p1770 = pneg %p1769
    $region46: #{conv_block_forward.1} parent=5 // pred_check_branch
      %1772 = sbr.rel (%p1770) target = $region48
    $region47: #{conv_block_forward.1} parent=5 // pred_region
      %s1773 = ssub.s32 %s11, 2
      // Predicated region
      $region49: #{conv_block_forward.1} parent=47 // pred_check
        %p1774 = pneg %p164
      $region50: #{conv_block_forward.1} parent=47 // pred_check_branch
        %1776 = sbr.rel (%p1774) target = $region52
      $region51: #{conv_block_forward.1} parent=47 // pred_region
        %p1777 = scmp.lt.s32.totalorder %s22, 1
        %s1778 = scalar_select %p1777, %s22, 1
        %p1779 = scmp.lt.s32.totalorder %s23, 7
        %s1780 = scalar_select %p1779, %s23, 7
        %s1781 = smul.addr %s1778, 8
        %s1782 = sadd.s32 %s1780, %s1781
        %s1783 = smul.addr %s1782, 8
        %s1784 = scalar_lea.vmem %s5, %s1783
      $region52: #{conv_block_forward.1} parent=47 // pred_fallthru
        _
    $region48: #{conv_block_forward.1} parent=5 // pred_fallthru
      _
  $region6: #{conv_block_forward.1} parent=0 // loop_footer
    %s15 = sadd.s32 1, %s11
  $region7: #{conv_block_forward.1} parent=0 // loop_footer_branch
    %10 = sbr.rel target = $region3
  $region8: #{conv_block_forward.1} parent=0 // loop_exit
    _

</llo_original>
